<compile_context>
chip_gen: v5e
topology: v5e:2x2
jax: 0.10.0
libtpu: 0.0.40
codegen_flags: <defaults>
</compile_context>

<pallas_src>
import jax
import jax.numpy as jnp
from jax.experimental import pallas as pl
from jax.experimental.pallas import tpu as pltpu


def _conv1x1_kernel(x_ref, w_ref, b_ref, o_ref):
    """Per-voxel channel mix using full-vreg VPU multiplies + XLU sublane reduces.

    x_ref: VMEM (1, C_in, TS)        -- spatial axis in lanes (lane-dense)
    w_ref: VMEM (n_class, C_in, 1)   -- tiny, resident across the whole grid
    b_ref: SMEM (n_class,)           -- scalar bias reads
    o_ref: VMEM (1, n_class, TS)
    """
    x = x_ref[0].astype(jnp.float32)                    # (C_in, TS)
    n_class = o_ref.shape[1]

    for co in range(n_class):                           # n_class is tiny & static
        # Full-tile multiply: (C_in, TS) * (C_in, 1) lane-broadcast  -> VPU
        prod = x * w_ref[co].astype(jnp.float32)
        # Channel sum over the sublane axis                           -> XLU
        row = jnp.sum(prod, axis=0, keepdims=True) + b_ref[co]        # (1, TS)
        # Direct per-row store; no concat intermediate.
        o_ref[0, co:co + 1, :] = row.astype(o_ref.dtype)


def output_layer_pallas(x_ncdhw, weight, bias, *, ts_target=64 * 1024):
    """x_ncdhw: (N, C_in, D, H, W); weight: (n_class, C_in, 1, 1, 1); bias: (n_class,)."""
    n, c_in, d, h, w = x_ncdhw.shape
    n_class = weight.shape[0]
    s = d * h * w

    # Free view (no data movement): flattened spatial axis kept last -> lanes.
    x3 = x_ncdhw.reshape(n, c_in, s)

    # Spatial tile: multiple of 128 lanes, capped at ts_target.
    s128 = pl.cdiv(s, 128) * 128
    ts = min(ts_target, s128)
    # Guarantee >= 2 independent grid steps when possible so both v7x
    # TensorCores are fed even at N == 1.
    if n * pl.cdiv(s, ts) < 2 and s128 >= 256:
        ts = pl.cdiv(pl.cdiv(s128, 2), 128) * 128
    grid = (n, pl.cdiv(s, ts))   # partial last spatial block is clipped by Pallas

    # Weight as (n_class, C_in, 1): w_ref[co] is a (C_in, 1) column that
    # broadcasts along lanes inside the kernel.
    w_cols = weight.reshape(n_class, c_in, 1).astype(jnp.float32)
    b_vec = bias.reshape(n_class).astype(jnp.float32)

    out3 = pl.pallas_call(
        _conv1x1_kernel,
        out_shape=jax.ShapeDtypeStruct((n, n_class, s), x3.dtype),
        grid_spec=pltpu.PrefetchScalarGridSpec(
            num_scalar_prefetch=0,
            grid=grid,
            in_specs=[
                pl.BlockSpec((1, c_in, ts), lambda nb, sb: (nb, 0, sb)),
                # Whole (tiny) weight block, constant index -> single DMA, resident.
                pl.BlockSpec((n_class, c_in, 1), lambda nb, sb: (0, 0, 0)),
                pl.BlockSpec(memory_space=pltpu.MemorySpace.SMEM),
            ],
            out_specs=pl.BlockSpec((1, n_class, ts), lambda nb, sb: (nb, 0, sb)),
        ),
        compiler_params=pltpu.CompilerParams(
            dimension_semantics=("parallel", "parallel"),
            vmem_limit_bytes=32 * 1024 * 1024,
        ),
    )(x3, w_cols, b_vec)

    return out3.reshape(n, n_class, d, h, w)


if __name__ == "__main__":
    # Small shapes consistent with a 3D UNet output head.
    N, C_IN, D, H, W = 2, 4, 16, 16, 16
    N_CLASS = 3

    key = jax.random.PRNGKey(0)
    kx, kw, kb = jax.random.split(key, 3)

    x = jax.random.normal(kx, (N, C_IN, D, H, W), dtype=jnp.float32)
    # Conv3d weight layout: (n_class, in_channels, 1, 1, 1).
    weight = jax.random.normal(kw, (N_CLASS, C_IN, 1, 1, 1), dtype=jnp.float32) * 0.1
    bias = jax.random.normal(kb, (N_CLASS,), dtype=jnp.float32) * 0.1

    out = output_layer_pallas(x, weight, bias)
    out = jax.block_until_ready(out)

    # Pure-JAX reference for the 1x1x1 conv.
    ref = jnp.einsum("ncdhw,oc->nodhw", x, weight.reshape(N_CLASS, C_IN)) + bias[
        None, :, None, None, None
    ]
    assert out.shape == (N, N_CLASS, D, H, W)
    assert jnp.allclose(out, ref, atol=1e-5, rtol=1e-5)

    print("KERNEL_OK")
</pallas_src>

<mosaic_0001>
module attributes {stable_mosaic.version = 11 : i64} {
  func.func @_conv1x1_kernel(%arg0: i32, %arg1: i32, %arg2: memref<1x4x4096xf32, #tpu.memory_space<vmem>>, %arg3: memref<3x4x1xf32, #tpu.memory_space<vmem>>, %arg4: memref<3xf32, #tpu.memory_space<smem>>, %arg5: memref<1x3x4096xf32, #tpu.memory_space<vmem>>) attributes {dimension_semantics = [#tpu.dimension_semantics<parallel>, #tpu.dimension_semantics<parallel>], iteration_bounds = array<i64: 2, 1>, scalar_prefetch = 0 : i64, scratch_operands = 0 : i64, tpu.core_type = #tpu.core_type<tc>, window_params = [{transform_indices = @transform_0, window_bounds = array<i64: 1, 4, 4096>}, {pipeline_mode = #tpu.pipeline_mode<synchronous>, transform_indices = @transform_1, window_bounds = array<i64: 3, 4, 1>}, {transform_indices = @transform_2, window_bounds = array<i64: 3>}, {transform_indices = @transform_3, window_bounds = array<i64: 1, 3, 4096>}]} {
    %c0 = arith.constant 0 : index
    %c0_0 = arith.constant 0 : index
    %c0_1 = arith.constant 0 : index
    %0 = vector.load %arg2[%c0, %c0_0, %c0_1] : memref<1x4x4096xf32, #tpu.memory_space<vmem>>, vector<1x4x4096xf32>
    %1 = vector.shape_cast %0 : vector<1x4x4096xf32> to vector<4x4096xf32>
    %c0_2 = arith.constant 0 : index
    %c0_3 = arith.constant 0 : index
    %c0_4 = arith.constant 0 : index
    %2 = vector.load %arg3[%c0_2, %c0_3, %c0_4] : memref<3x4x1xf32, #tpu.memory_space<vmem>>, vector<1x4x1xf32>
    %3 = vector.shape_cast %2 : vector<1x4x1xf32> to vector<4x1xf32>
    %4 = vector.broadcast %3 : vector<4x1xf32> to vector<4x4096xf32>
    %5 = arith.mulf %1, %4 : vector<4x4096xf32>
    %cst = arith.constant dense<0.000000e+00> : vector<4096xf32>
    %6 = vector.multi_reduction <add>, %5, %cst [0] : vector<4x4096xf32> to vector<4096xf32>
    %7 = vector.shape_cast %6 : vector<4096xf32> to vector<1x4096xf32>
    %c0_5 = arith.constant 0 : index
    %8 = memref.load %arg4[%c0_5] : memref<3xf32, #tpu.memory_space<smem>>
    %9 = vector.broadcast %8 : f32 to vector<1x4096xf32>
    %10 = arith.addf %7, %9 : vector<1x4096xf32>
    %c0_6 = arith.constant 0 : index
    %c0_7 = arith.constant 0 : index
    %c0_8 = arith.constant 0 : index
    %11 = vector.load %arg5[%c0_6, %c0_7, %c0_8] : memref<1x3x4096xf32, #tpu.memory_space<vmem>>, vector<1x1x4096xf32>
    %12 = vector.shape_cast %11 : vector<1x1x4096xf32> to vector<1x4096xf32>
    %13 = vector.shape_cast %10 : vector<1x4096xf32> to vector<1x1x4096xf32>
    tpu.vector_store %arg5[%c0_6, %c0_7, %c0_8], %13 {strides = array<i32>} : memref<1x3x4096xf32, #tpu.memory_space<vmem>>, vector<1x1x4096xf32>,
    %c1 = arith.constant 1 : index
    %c0_9 = arith.constant 0 : index
    %c0_10 = arith.constant 0 : index
    %14 = vector.load %arg3[%c1, %c0_9, %c0_10] : memref<3x4x1xf32, #tpu.memory_space<vmem>>, vector<1x4x1xf32>
    %15 = vector.shape_cast %14 : vector<1x4x1xf32> to vector<4x1xf32>
    %16 = vector.broadcast %15 : vector<4x1xf32> to vector<4x4096xf32>
    %17 = arith.mulf %1, %16 : vector<4x4096xf32>
    %cst_11 = arith.constant dense<0.000000e+00> : vector<4096xf32>
    %18 = vector.multi_reduction <add>, %17, %cst_11 [0] : vector<4x4096xf32> to vector<4096xf32>
    %19 = vector.shape_cast %18 : vector<4096xf32> to vector<1x4096xf32>
    %c1_12 = arith.constant 1 : index
    %20 = memref.load %arg4[%c1_12] : memref<3xf32, #tpu.memory_space<smem>>
    %21 = vector.broadcast %20 : f32 to vector<1x4096xf32>
    %22 = arith.addf %19, %21 : vector<1x4096xf32>
    %c0_13 = arith.constant 0 : index
    %c1_14 = arith.constant 1 : index
    %c0_15 = arith.constant 0 : index
    %23 = vector.load %arg5[%c0_13, %c1_14, %c0_15] : memref<1x3x4096xf32, #tpu.memory_space<vmem>>, vector<1x1x4096xf32>
    %24 = vector.shape_cast %23 : vector<1x1x4096xf32> to vector<1x4096xf32>
    %25 = vector.shape_cast %22 : vector<1x4096xf32> to vector<1x1x4096xf32>
    tpu.vector_store %arg5[%c0_13, %c1_14, %c0_15], %25 {strides = array<i32>} : memref<1x3x4096xf32, #tpu.memory_space<vmem>>, vector<1x1x4096xf32>,
    %c2 = arith.constant 2 : index
    %c0_16 = arith.constant 0 : index
    %c0_17 = arith.constant 0 : index
    %26 = vector.load %arg3[%c2, %c0_16, %c0_17] : memref<3x4x1xf32, #tpu.memory_space<vmem>>, vector<1x4x1xf32>
    %27 = vector.shape_cast %26 : vector<1x4x1xf32> to vector<4x1xf32>
    %28 = vector.broadcast %27 : vector<4x1xf32> to vector<4x4096xf32>
    %29 = arith.mulf %1, %28 : vector<4x4096xf32>
    %cst_18 = arith.constant dense<0.000000e+00> : vector<4096xf32>
    %30 = vector.multi_reduction <add>, %29, %cst_18 [0] : vector<4x4096xf32> to vector<4096xf32>
    %31 = vector.shape_cast %30 : vector<4096xf32> to vector<1x4096xf32>
    %c2_19 = arith.constant 2 : index
    %32 = memref.load %arg4[%c2_19] : memref<3xf32, #tpu.memory_space<smem>>
    %33 = vector.broadcast %32 : f32 to vector<1x4096xf32>
    %34 = arith.addf %31, %33 : vector<1x4096xf32>
    %c0_20 = arith.constant 0 : index
    %c2_21 = arith.constant 2 : index
    %c0_22 = arith.constant 0 : index
    %35 = vector.load %arg5[%c0_20, %c2_21, %c0_22] : memref<1x3x4096xf32, #tpu.memory_space<vmem>>, vector<1x1x4096xf32>
    %36 = vector.shape_cast %35 : vector<1x1x4096xf32> to vector<1x4096xf32>
    %37 = vector.shape_cast %34 : vector<1x4096xf32> to vector<1x1x4096xf32>
    tpu.vector_store %arg5[%c0_20, %c2_21, %c0_22], %37 {strides = array<i32>} : memref<1x3x4096xf32, #tpu.memory_space<vmem>>, vector<1x1x4096xf32>,
    return
  }
  func.func @transform_0(%arg0: i32, %arg1: i32) -> (i32, i32, i32) {
    %c0_i32 = arith.constant 0 : i32
    %c0_i32_0 = arith.constant 0 : i32
    return %arg0, %c0_i32, %arg1 : i32, i32, i32
  }
  func.func @transform_1(%arg0: i32, %arg1: i32) -> (i32, i32, i32) {
    %c0_i32 = arith.constant 0 : i32
    %c0_i32_0 = arith.constant 0 : i32
    %c0_i32_1 = arith.constant 0 : i32
    %c0_i32_2 = arith.constant 0 : i32
    return %c0_i32, %c0_i32_0, %c0_i32_1 : i32, i32, i32
  }
  func.func @transform_2(%arg0: i32, %arg1: i32) -> i32 {
    %c0_i32 = arith.constant 0 : i32
    %c0_i32_0 = arith.constant 0 : i32
    return %c0_i32 : i32
  }
  func.func @transform_3(%arg0: i32, %arg1: i32) -> (i32, i32, i32) {
    %c0_i32 = arith.constant 0 : i32
    %c0_i32_0 = arith.constant 0 : i32
    return %arg0, %c0_i32, %arg1 : i32, i32, i32
  }
}

</mosaic_0001>

<llo_original>
// kernel: tpu_custom_call.1
$region0: #{tpu_custom_call.1}
  #allocation0 [shape = 'u32[]', space=smem, size = 0x4, offset = 0x4, fixed_abs, tag = 'smem constant byte address 0x4 - core index']
  #allocation1 [shape = 'u32[72,128]{1,0:T(1,128)}', space=vmem, size = 0x9000, scoped, tag = 'internal scratch']
  %s0 = inlined_call_operand.hbm [shape: f32[2,4,4096], index: 0, kind: input, shape index: {}]
  %s1 = inlined_call_operand.vmem [shape: f32[3,4,1], index: 1, kind: input, shape index: {}]
  %s2 = inlined_call_operand.vmem [shape: f32[3], index: 2, kind: input, shape index: {}]
  %s3 = inlined_call_operand.vmem [shape: f32[2,3,4096], index: 3, kind: output, shape index: {}]
  %s4 = sld [smem:[#allocation0]]
  $region53: #{tpu_custom_call.1} parent=0
    _
  %s6 = ssub.s32 1, %s4
  %s7 = scalar_select 0, %s6, %s4
  $region1: #{tpu_custom_call.1} parent=0
    #allocation2 [shape = 'u8[131072]{0}', space=vmem, size = 0x20000, scoped, tag = 'input window, operand 0']
    #allocation3 [shape = 's32[2]{0}', space=sflag, size = 0x8, scoped, tag = 'scoped memory for tpu_custom_call.1']
    #allocation4 [shape = 's32[2]{0}', space=sflag, size = 0x8, scoped, tag = 'scoped memory for tpu_custom_call.1']
    #allocation5 [shape = 'u8[512]{0}', space=smem, size = 0x200, scoped, tag = 'input window, operand 2, single buffered']
    %8 = vsyncpa [#allocation3], 0
    %s9 = scalar_lea.sflag [#allocation3], 1
    %10 = vsyncpa %s9, 0
    %11 = vsyncpa [#allocation4], 0
    loop: start=0, step=1, limit=4
    $region2: #{tpu_custom_call.1} parent=1 // loop_pre_header
      _
    $region3: #{tpu_custom_call.1} parent=1 // loop_header
      %s13 = sphi 0, %s17
      %p14 = scmp.ge.s32.totalorder %s13, 4
      %s20 = sphi 0, %s32
      %s21 = sphi 0, %s28
      %s22 = sphi 0, %s20
      %s23 = sphi 0, %s21
      %s24 = sphi 0, %s22
      %s25 = sphi 0, %s23
      %s37 = sphi 0, %s39
      %s40 = sphi 0, %s37
      %s41 = sphi 0, %s40
      %s57 = sphi 0, %s41
      %s61 = sphi 0, %s61
      %s63 = sphi 0, %s61
      %s64 = sphi 0, %s63
      %s78 = sphi 0, %s64
      %s82 = sphi 0, %s82
      %s84 = sphi 0, %s82
      %s85 = sphi 0, %s84
      %s99 = sphi 0, %s85
      %s107 = sphi 0, %s109
      %s110 = sphi 0, %s107
      %s111 = sphi 0, %s110
      %s127 = sphi 0, %s111
    $region4: #{tpu_custom_call.1} parent=1 // loop_header_branch
      %16 = sbr.rel (%p14) target = $region8
    $region5: #{tpu_custom_call.1} parent=1 // loop_body
      %s18 = ssub.s32 %s13, 1
      %s19 = ssub.s32 %s13, 2
      %s26 = sadd.s32 1, %s21
      %p27 = scmp.ge.s32.totalorder %s26, 1
      %s28 = scalar_select %p27, 0, %s26
      %s29 = sadd.s32 1, %s20
      %s30 = scalar_select %p27, %s29, %s20
      %p31 = scmp.ge.s32.totalorder %s30, 2
      %s32 = scalar_select %p31, 0, %s30
      %s33 = ssub.s32 %s20, %s32
      %s34 = ssub.s32 %s21, %s28
      %s35 = sor.u32 %s33, %s34
      %p36 = scmp.eq.s32.totalorder %s35, 0
      %s38 = sadd.s32 %s37, 1
      %s39 = scalar_select %p36, %s37, %s38
      %p42 = pneg %p36
      %p43 = scmp.eq.s32.totalorder %s13, 1
      %p44 = por %p42, %p43
      %p45 = scmp.ne.s32.totalorder %s37, %s40
      %p46 = scmp.eq.s32.totalorder %s13, 0
      %p47 = por %p45, %p46
      %p48 = scmp.ne.s32.totalorder %s37, %s40
      %p49 = scmp.eq.s32.totalorder %s18, 1
      %p50 = por %p48, %p49
      %p51 = scmp.ne.s32.totalorder %s40, %s41
      %p52 = scmp.eq.s32.totalorder %s18, 0
      %p53 = por %p51, %p52
      %p54 = scmp.ne.s32.totalorder %s40, %s41
      %p55 = scmp.eq.s32.totalorder %s19, 1
      %p56 = por %p54, %p55
      %p58 = scmp.ne.s32.totalorder %s41, %s57
      %p59 = scmp.eq.s32.totalorder %s19, 0
      %p60 = por %p58, %p59
      %s62 = sadd.s32 %s61, 1
      %p65 = scmp.eq.s32.totalorder %s13, 1
      %p66 = scmp.ne.s32.totalorder %s61, %s63
      %p67 = scmp.eq.s32.totalorder %s13, 0
      %p68 = por %p66, %p67
      %p69 = scmp.ne.s32.totalorder %s61, %s63
      %p70 = scmp.eq.s32.totalorder %s18, 1
      %p71 = por %p69, %p70
      %p72 = scmp.ne.s32.totalorder %s63, %s64
      %p73 = scmp.eq.s32.totalorder %s18, 0
      %p74 = por %p72, %p73
      %p75 = scmp.ne.s32.totalorder %s63, %s64
      %p76 = scmp.eq.s32.totalorder %s19, 1
      %p77 = por %p75, %p76
      %p79 = scmp.ne.s32.totalorder %s64, %s78
      %p80 = scmp.eq.s32.totalorder %s19, 0
      %p81 = por %p79, %p80
      %s83 = sadd.s32 %s82, 1
      %p86 = scmp.eq.s32.totalorder %s13, 1
      %p87 = scmp.ne.s32.totalorder %s82, %s84
      %p88 = scmp.eq.s32.totalorder %s13, 0
      %p89 = por %p87, %p88
      %p90 = scmp.ne.s32.totalorder %s82, %s84
      %p91 = scmp.eq.s32.totalorder %s18, 1
      %p92 = por %p90, %p91
      %p93 = scmp.ne.s32.totalorder %s84, %s85
      %p94 = scmp.eq.s32.totalorder %s18, 0
      %p95 = por %p93, %p94
      %p96 = scmp.ne.s32.totalorder %s84, %s85
      %p97 = scmp.eq.s32.totalorder %s19, 1
      %p98 = por %p96, %p97
      %p100 = scmp.ne.s32.totalorder %s85, %s99
      %p101 = scmp.eq.s32.totalorder %s19, 0
      %p102 = por %p100, %p101
      %s103 = ssub.s32 %s20, %s32
      %s104 = ssub.s32 %s21, %s28
      %s105 = sor.u32 %s103, %s104
      %p106 = scmp.eq.s32.totalorder %s105, 0
      %s108 = sadd.s32 %s107, 1
      %s109 = scalar_select %p106, %s107, %s108
      %p112 = pneg %p106
      %p113 = scmp.eq.s32.totalorder %s13, 1
      %p114 = por %p112, %p113
      %p115 = scmp.ne.s32.totalorder %s107, %s110
      %p116 = scmp.eq.s32.totalorder %s13, 0
      %p117 = por %p115, %p116
      %p118 = scmp.ne.s32.totalorder %s107, %s110
      %p119 = scmp.eq.s32.totalorder %s18, 1
      %p120 = por %p118, %p119
      %p121 = scmp.ne.s32.totalorder %s110, %s111
      %p122 = scmp.eq.s32.totalorder %s18, 0
      %p123 = por %p121, %p122
      %p124 = scmp.ne.s32.totalorder %s110, %s111
      %p125 = scmp.eq.s32.totalorder %s19, 1
      %p126 = por %p124, %p125
      %p128 = scmp.ne.s32.totalorder %s111, %s127
      %p129 = scmp.eq.s32.totalorder %s19, 0
      %p130 = por %p128, %p129
      %p131 = scmp.le.s32.totalorder 1, %s13
      %p132 = scmp.lt.s32.totalorder %s13, 3
      %p133 = pnand %p131, %p132
      %p134 = pneg %p133
      // Predicated region
      $region9: #{tpu_custom_call.1} parent=5 // pred_check
        _
      $region10: #{tpu_custom_call.1} parent=5 // pred_check_branch
        %136 = sbr.rel (%p133) target = $region12
      $region11: #{tpu_custom_call.1} parent=5 // pred_region
        %s137 = ssub.s32 %s13, 1
        // Predicated region
        $region13: #{tpu_custom_call.1} parent=11 // pred_check
          %p138 = pneg %p74
        $region14: #{tpu_custom_call.1} parent=11 // pred_check_branch
          %140 = sbr.rel (%p138) target = $region16
        $region15: #{tpu_custom_call.1} parent=11 // pred_region
          _
        $region16: #{tpu_custom_call.1} parent=11 // pred_fallthru
          _
        // Predicated region
        $region17: #{tpu_custom_call.1} parent=11 // pred_check
          %p141 = pneg %p95
        $region18: #{tpu_custom_call.1} parent=11 // pred_check_branch
          %143 = sbr.rel (%p141) target = $region20
        $region19: #{tpu_custom_call.1} parent=11 // pred_region
          %145 = vsyncadd [#allocation4], 0
          %s147 = sshll.u32 %s2, 4
          %s148 = int_to_ptr.vmem [resolvable:$true] %s147
          %150 = dma.vmem_to_smem %s148, 16, [#allocation5], [#allocation4]
        $region20: #{tpu_custom_call.1} parent=11 // pred_fallthru
          _
      $region12: #{tpu_custom_call.1} parent=5 // pred_fallthru
        _
      %p151 = scmp.lt.s32.totalorder %s13, 2
      // Predicated region
      $region21: #{tpu_custom_call.1} parent=5 // pred_check
        %p152 = pneg %p151
      $region22: #{tpu_custom_call.1} parent=5 // pred_check_branch
        %154 = sbr.rel (%p152) target = $region24
      $region23: #{tpu_custom_call.1} parent=5 // pred_region
        // Predicated region
        $region25: #{tpu_custom_call.1} parent=23 // pred_check
          %p155 = pneg %p47
        $region26: #{tpu_custom_call.1} parent=23 // pred_check_branch
          %157 = sbr.rel (%p155) target = $region28
        $region27: #{tpu_custom_call.1} parent=23 // pred_region
          %s158 = sand.u32 %s37, 1
          %s159 = scalar_lea.sflag [#allocation3], %s158
          %s160 = sand.u32 %s37, 1
          %s161 = smul.addr %s160, 128
          %s162 = scalar_lea.vmem [#allocation2], %s161
          %s163 = smul.u32 32, %s21
          %165 = vsyncadd %s159, 0
          %s166 = smul.addr %s20, 32
          %s167 = sadd.s32 %s163, %s166
          %s168 = smul.addr %s167, 4
          %s169 = scalar_lea.hbm %s0, %s168
          %s171 = sshll.u32 %s169, 4
          %s172 = int_to_ptr.hbm [resolvable:$true] %s171
          %s173 = sshll.u32 %s162, 4
          %s174 = int_to_ptr.vmem [resolvable:$true] %s173
          %176 = dma.hbm_to_vmem [thread:$0]  %s172, 2048, %s174, %s159
        $region28: #{tpu_custom_call.1} parent=23 // pred_fallthru
          _
      $region24: #{tpu_custom_call.1} parent=5 // pred_fallthru
        _
      %p177 = scmp.le.s32.totalorder 1, %s13
      %p178 = scmp.lt.s32.totalorder %s13, 3
      %p179 = pnand %p177, %p178
      %p180 = pneg %p179
      // Predicated region
      $region29: #{tpu_custom_call.1} parent=5 // pred_check
        _
      $region30: #{tpu_custom_call.1} parent=5 // pred_check_branch
        %182 = sbr.rel (%p179) target = $region32
      $region31: #{tpu_custom_call.1} parent=5 // pred_region
        %s183 = ssub.s32 %s13, 1
        %s184 = sand.u32 %s40, 1
        %s185 = scalar_lea.sflag [#allocation3], %s184
        %s186 = sand.u32 %s40, 1
        %s187 = smul.addr %s186, 128
        %s188 = scalar_lea.vmem [#allocation2], %s187
        // Predicated region
        $region33: #{tpu_custom_call.1} parent=31 // pred_check
          %p189 = pneg %p53
        $region34: #{tpu_custom_call.1} parent=31 // pred_check_branch
          %191 = sbr.rel (%p189) target = $region36
        $region35: #{tpu_custom_call.1} parent=31 // pred_region
          %193 = dma.done %s185, 2048
        $region36: #{tpu_custom_call.1} parent=31 // pred_fallthru
          _
        // Predicated region
        $region37: #{tpu_custom_call.1} parent=31 // pred_check
          %p194 = pneg %p95
        $region38: #{tpu_custom_call.1} parent=31 // pred_check_branch
          %196 = sbr.rel (%p194) target = $region40
        $region39: #{tpu_custom_call.1} parent=31 // pred_region
          %198 = dma.done [#allocation4], 16
        $region40: #{tpu_custom_call.1} parent=31 // pred_fallthru
          _
        %199 = sfence
        %s200 = sand.u32 %s40, 1
        %s201 = scalar_lea.sflag [#allocation3], %s200
        %s202 = sand.u32 %s40, 1
        %s203 = smul.addr %s202, 128
        %s204 = scalar_lea.vmem [#allocation2], %s203
        %p205 = pneg %p53
        %p206 = pneg %p50
        %p207 = pneg %p74
        %p208 = pneg %p71
        %p209 = pneg %p95
        %p210 = pneg %p92
        %p211 = pneg %p123
        %p212 = pneg %p120
        %s213 = smul.u32 32, %s23
        %p214 = scmp.lt.s32.totalorder %s22, 1
        %s215 = scalar_select %p214, %s22, 1
        %p216 = scmp.lt.s32.totalorder %s213, 31
        %s217 = scalar_select %p216, %s213, 31
        %s218 = smul.addr %s215, 32
        %s219 = sadd.s32 %s217, %s218
        %s220 = smul.addr %s219, 4
        %s221 = scalar_lea.vmem %s3, %s220
        %s222 = smul.u32 32, %s23
        %s223 = smul.u32 32, %s23
        %p224 = scmp.lt.s32.totalorder %s22, 1
        %s225 = scalar_select %p224, %s22, 1
        %p226 = scmp.lt.s32.totalorder %s223, 31
        %s227 = scalar_select %p226, %s223, 31
        %s228 = smul.addr %s225, 32
        %s229 = sadd.s32 %s227, %s228
        %s230 = smul.addr %s229, 4
        %s231 = scalar_lea.vmem %s3, %s230
        %s232 = smul.u32 32, %s23
        %v233 = vld [vmem:[%s188] sm:$0xff]
        %v234 = vld [vmem:[%s188 + $0x8] sm:$0xff]
        %v235 = vld [vmem:[%s188 + $0x10] sm:$0xff]
        %v236 = vld [vmem:[%s188 + $0x18] sm:$0xff]
        %v237 = vld [vmem:[%s188 + $0x20] sm:$0xff]
        %v238 = vld [vmem:[%s188 + $0x28] sm:$0xff]
        %v239 = vld [vmem:[%s188 + $0x30] sm:$0xff]
        %v240 = vld [vmem:[%s188 + $0x38] sm:$0xff]
        %v241 = vld [vmem:[%s188 + $0x40] sm:$0xff]
        %v242 = vld [vmem:[%s188 + $0x48] sm:$0xff]
        %v243 = vld [vmem:[%s188 + $0x50] sm:$0xff]
        %v244 = vld [vmem:[%s188 + $0x58] sm:$0xff]
        %v245 = vld [vmem:[%s188 + $0x60] sm:$0xff]
        %v246 = vld [vmem:[%s188 + $0x68] sm:$0xff]
        %v247 = vld [vmem:[%s188 + $0x70] sm:$0xff]
        %v248 = vld [vmem:[%s188 + $0x78] sm:$0xff]
        %v249 = vld [vmem:[%s1] sm:$0xf]
        %251 = vset.pattern.permute.xlu0 0
        %252 = vperm.xlu0 %251, %v249
        %v253 = vpop.permute.xlu0 %252
        %v255 = vunpack.c.l.s4 839922192
        %v256 = vunpack.c.0.s8 %v255
        %v257 = vperm.slane %v253, %v256
        %v259 = vmul.f32 %v233, %v257
        %v260 = vmul.f32 %v234, %v257
        %v261 = vmul.f32 %v235, %v257
        %v262 = vmul.f32 %v236, %v257
        %v263 = vmul.f32 %v237, %v257
        %v264 = vmul.f32 %v238, %v257
        %v265 = vmul.f32 %v239, %v257
        %v266 = vmul.f32 %v240, %v257
        %v267 = vmul.f32 %v241, %v257
        %v268 = vmul.f32 %v242, %v257
        %v269 = vmul.f32 %v243, %v257
        %v270 = vmul.f32 %v244, %v257
        %v271 = vmul.f32 %v245, %v257
        %v272 = vmul.f32 %v246, %v257
        %v273 = vmul.f32 %v247, %v257
        %v274 = vmul.f32 %v248, %v257
        %291 = vst [vmem:[#allocation1] ss:$2 sm:$0xff] %v259
        %s292 = scalar_lea.vmem [#allocation1], 16
        %293 = vst [vmem:[%s292] ss:$2 sm:$0xff] %v260
        %s294 = scalar_lea.vmem [#allocation1], 32
        %295 = vst [vmem:[%s294] ss:$2 sm:$0xff] %v261
        %s296 = scalar_lea.vmem [#allocation1], 48
        %297 = vst [vmem:[%s296] ss:$2 sm:$0xff] %v262
        %v298 = vld.sshfl [vmem:[#allocation1] sm:$0xff pattern:$0x75316420]
        %v299 = vld.sshfl [vmem:[#allocation1 + $0x8] sm:$0xff pattern:$0x75316420]
        %v300 = vld.sshfl [vmem:[#allocation1 + $0x10] sm:$0xff pattern:$0x75316420]
        %v301 = vld.sshfl [vmem:[#allocation1 + $0x18] sm:$0xff pattern:$0x75316420]
        %v302 = vld.sshfl [vmem:[#allocation1 + $0x20] sm:$0xff pattern:$0x75316420]
        %v303 = vld.sshfl [vmem:[#allocation1 + $0x28] sm:$0xff pattern:$0x75316420]
        %v304 = vld.sshfl [vmem:[#allocation1 + $0x30] sm:$0xff pattern:$0x75316420]
        %v305 = vld.sshfl [vmem:[#allocation1 + $0x38] sm:$0xff pattern:$0x75316420]
        %306 = vst [vmem:[#allocation1] ss:$2 sm:$0xff] %v263
        %307 = vst [vmem:[%s292] ss:$2 sm:$0xff] %v264
        %308 = vst [vmem:[%s294] ss:$2 sm:$0xff] %v265
        %309 = vst [vmem:[%s296] ss:$2 sm:$0xff] %v266
        %v310 = vld.sshfl [vmem:[#allocation1] sm:$0xff pattern:$0x75316420]
        %v311 = vld.sshfl [vmem:[#allocation1 + $0x8] sm:$0xff pattern:$0x75316420]
        %v312 = vld.sshfl [vmem:[#allocation1 + $0x10] sm:$0xff pattern:$0x75316420]
        %v313 = vld.sshfl [vmem:[#allocation1 + $0x18] sm:$0xff pattern:$0x75316420]
        %v314 = vld.sshfl [vmem:[#allocation1 + $0x20] sm:$0xff pattern:$0x75316420]
        %v315 = vld.sshfl [vmem:[#allocation1 + $0x28] sm:$0xff pattern:$0x75316420]
        %v316 = vld.sshfl [vmem:[#allocation1 + $0x30] sm:$0xff pattern:$0x75316420]
        %v317 = vld.sshfl [vmem:[#allocation1 + $0x38] sm:$0xff pattern:$0x75316420]
        %318 = vst [vmem:[#allocation1] ss:$2 sm:$0xff] %v267
        %319 = vst [vmem:[%s292] ss:$2 sm:$0xff] %v268
        %320 = vst [vmem:[%s294] ss:$2 sm:$0xff] %v269
        %321 = vst [vmem:[%s296] ss:$2 sm:$0xff] %v270
        %v322 = vld.sshfl [vmem:[#allocation1] sm:$0xff pattern:$0x75316420]
        %v323 = vld.sshfl [vmem:[#allocation1 + $0x8] sm:$0xff pattern:$0x75316420]
        %v324 = vld.sshfl [vmem:[#allocation1 + $0x10] sm:$0xff pattern:$0x75316420]
        %v325 = vld.sshfl [vmem:[#allocation1 + $0x18] sm:$0xff pattern:$0x75316420]
        %v326 = vld.sshfl [vmem:[#allocation1 + $0x20] sm:$0xff pattern:$0x75316420]
        %v327 = vld.sshfl [vmem:[#allocation1 + $0x28] sm:$0xff pattern:$0x75316420]
        %v328 = vld.sshfl [vmem:[#allocation1 + $0x30] sm:$0xff pattern:$0x75316420]
        %v329 = vld.sshfl [vmem:[#allocation1 + $0x38] sm:$0xff pattern:$0x75316420]
        %330 = vst [vmem:[#allocation1] ss:$2 sm:$0xff] %v271
        %331 = vst [vmem:[%s292] ss:$2 sm:$0xff] %v272
        %332 = vst [vmem:[%s294] ss:$2 sm:$0xff] %v273
        %333 = vst [vmem:[%s296] ss:$2 sm:$0xff] %v274
        %v334 = vld.sshfl [vmem:[#allocation1] sm:$0xff pattern:$0x75316420]
        %v335 = vld.sshfl [vmem:[#allocation1 + $0x8] sm:$0xff pattern:$0x75316420]
        %v336 = vld.sshfl [vmem:[#allocation1 + $0x10] sm:$0xff pattern:$0x75316420]
        %v337 = vld.sshfl [vmem:[#allocation1 + $0x18] sm:$0xff pattern:$0x75316420]
        %v338 = vld.sshfl [vmem:[#allocation1 + $0x20] sm:$0xff pattern:$0x75316420]
        %v339 = vld.sshfl [vmem:[#allocation1 + $0x28] sm:$0xff pattern:$0x75316420]
        %v340 = vld.sshfl [vmem:[#allocation1 + $0x30] sm:$0xff pattern:$0x75316420]
        %v341 = vld.sshfl [vmem:[#allocation1 + $0x38] sm:$0xff pattern:$0x75316420]
        %vm374 = vcmask 1043456
        %v375 = vsel %vm374, %v298, 0.0
        %v376 = vrot.slane %v375, 4
        %v377 = vadd.f32 %v375, %v376
        %v378 = vrot.slane %v377, 2
        %v379 = vadd.f32 %v377, %v378
        %v380 = vrot.slane %v379, 1
        %v381 = vadd.f32 %v379, %v380
        %v382 = vsel %vm374, %v299, 0.0
        %v383 = vrot.slane %v382, 4
        %v384 = vadd.f32 %v382, %v383
        %v385 = vrot.slane %v384, 2
        %v386 = vadd.f32 %v384, %v385
        %v387 = vrot.slane %v386, 1
        %v388 = vadd.f32 %v386, %v387
        %v389 = vsel %vm374, %v300, 0.0
        %v390 = vrot.slane %v389, 4
        %v391 = vadd.f32 %v389, %v390
        %v392 = vrot.slane %v391, 2
        %v393 = vadd.f32 %v391, %v392
        %v394 = vrot.slane %v393, 1
        %v395 = vadd.f32 %v393, %v394
        %v396 = vsel %vm374, %v301, 0.0
        %v397 = vrot.slane %v396, 4
        %v398 = vadd.f32 %v396, %v397
        %v399 = vrot.slane %v398, 2
        %v400 = vadd.f32 %v398, %v399
        %v401 = vrot.slane %v400, 1
        %v402 = vadd.f32 %v400, %v401
        %v403 = vsel %vm374, %v302, 0.0
        %v404 = vrot.slane %v403, 4
        %v405 = vadd.f32 %v403, %v404
        %v406 = vrot.slane %v405, 2
        %v407 = vadd.f32 %v405, %v406
        %v408 = vrot.slane %v407, 1
        %v409 = vadd.f32 %v407, %v408
        %v410 = vsel %vm374, %v303, 0.0
        %v411 = vrot.slane %v410, 4
        %v412 = vadd.f32 %v410, %v411
        %v413 = vrot.slane %v412, 2
        %v414 = vadd.f32 %v412, %v413
        %v415 = vrot.slane %v414, 1
        %v416 = vadd.f32 %v414, %v415
        %v417 = vsel %vm374, %v304, 0.0
        %v418 = vrot.slane %v417, 4
        %v419 = vadd.f32 %v417, %v418
        %v420 = vrot.slane %v419, 2
        %v421 = vadd.f32 %v419, %v420
        %v422 = vrot.slane %v421, 1
        %v423 = vadd.f32 %v421, %v422
        %v424 = vsel %vm374, %v305, 0.0
        %v425 = vrot.slane %v424, 4
        %v426 = vadd.f32 %v424, %v425
        %v427 = vrot.slane %v426, 2
        %v428 = vadd.f32 %v426, %v427
        %v429 = vrot.slane %v428, 1
        %v430 = vadd.f32 %v428, %v429
        %v431 = vsel %vm374, %v310, 0.0
        %v432 = vrot.slane %v431, 4
        %v433 = vadd.f32 %v431, %v432
        %v434 = vrot.slane %v433, 2
        %v435 = vadd.f32 %v433, %v434
        %v436 = vrot.slane %v435, 1
        %v437 = vadd.f32 %v435, %v436
        %v438 = vsel %vm374, %v311, 0.0
        %v439 = vrot.slane %v438, 4
        %v440 = vadd.f32 %v438, %v439
        %v441 = vrot.slane %v440, 2
        %v442 = vadd.f32 %v440, %v441
        %v443 = vrot.slane %v442, 1
        %v444 = vadd.f32 %v442, %v443
        %v445 = vsel %vm374, %v312, 0.0
        %v446 = vrot.slane %v445, 4
        %v447 = vadd.f32 %v445, %v446
        %v448 = vrot.slane %v447, 2
        %v449 = vadd.f32 %v447, %v448
        %v450 = vrot.slane %v449, 1
        %v451 = vadd.f32 %v449, %v450
        %v452 = vsel %vm374, %v313, 0.0
        %v453 = vrot.slane %v452, 4
        %v454 = vadd.f32 %v452, %v453
        %v455 = vrot.slane %v454, 2
        %v456 = vadd.f32 %v454, %v455
        %v457 = vrot.slane %v456, 1
        %v458 = vadd.f32 %v456, %v457
        %v459 = vsel %vm374, %v314, 0.0
        %v460 = vrot.slane %v459, 4
        %v461 = vadd.f32 %v459, %v460
        %v462 = vrot.slane %v461, 2
        %v463 = vadd.f32 %v461, %v462
        %v464 = vrot.slane %v463, 1
        %v465 = vadd.f32 %v463, %v464
        %v466 = vsel %vm374, %v315, 0.0
        %v467 = vrot.slane %v466, 4
        %v468 = vadd.f32 %v466, %v467
        %v469 = vrot.slane %v468, 2
        %v470 = vadd.f32 %v468, %v469
        %v471 = vrot.slane %v470, 1
        %v472 = vadd.f32 %v470, %v471
        %v473 = vsel %vm374, %v316, 0.0
        %v474 = vrot.slane %v473, 4
        %v475 = vadd.f32 %v473, %v474
        %v476 = vrot.slane %v475, 2
        %v477 = vadd.f32 %v475, %v476
        %v478 = vrot.slane %v477, 1
        %v479 = vadd.f32 %v477, %v478
        %v480 = vsel %vm374, %v317, 0.0
        %v481 = vrot.slane %v480, 4
        %v482 = vadd.f32 %v480, %v481
        %v483 = vrot.slane %v482, 2
        %v484 = vadd.f32 %v482, %v483
        %v485 = vrot.slane %v484, 1
        %v486 = vadd.f32 %v484, %v485
        %v487 = vsel %vm374, %v322, 0.0
        %v488 = vrot.slane %v487, 4
        %v489 = vadd.f32 %v487, %v488
        %v490 = vrot.slane %v489, 2
        %v491 = vadd.f32 %v489, %v490
        %v492 = vrot.slane %v491, 1
        %v493 = vadd.f32 %v491, %v492
        %v494 = vsel %vm374, %v323, 0.0
        %v495 = vrot.slane %v494, 4
        %v496 = vadd.f32 %v494, %v495
        %v497 = vrot.slane %v496, 2
        %v498 = vadd.f32 %v496, %v497
        %v499 = vrot.slane %v498, 1
        %v500 = vadd.f32 %v498, %v499
        %v501 = vsel %vm374, %v324, 0.0
        %v502 = vrot.slane %v501, 4
        %v503 = vadd.f32 %v501, %v502
        %v504 = vrot.slane %v503, 2
        %v505 = vadd.f32 %v503, %v504
        %v506 = vrot.slane %v505, 1
        %v507 = vadd.f32 %v505, %v506
        %v508 = vsel %vm374, %v325, 0.0
        %v509 = vrot.slane %v508, 4
        %v510 = vadd.f32 %v508, %v509
        %v511 = vrot.slane %v510, 2
        %v512 = vadd.f32 %v510, %v511
        %v513 = vrot.slane %v512, 1
        %v514 = vadd.f32 %v512, %v513
        %v515 = vsel %vm374, %v326, 0.0
        %v516 = vrot.slane %v515, 4
        %v517 = vadd.f32 %v515, %v516
        %v518 = vrot.slane %v517, 2
        %v519 = vadd.f32 %v517, %v518
        %v520 = vrot.slane %v519, 1
        %v521 = vadd.f32 %v519, %v520
        %v522 = vsel %vm374, %v327, 0.0
        %v523 = vrot.slane %v522, 4
        %v524 = vadd.f32 %v522, %v523
        %v525 = vrot.slane %v524, 2
        %v526 = vadd.f32 %v524, %v525
        %v527 = vrot.slane %v526, 1
        %v528 = vadd.f32 %v526, %v527
        %v529 = vsel %vm374, %v328, 0.0
        %v530 = vrot.slane %v529, 4
        %v531 = vadd.f32 %v529, %v530
        %v532 = vrot.slane %v531, 2
        %v533 = vadd.f32 %v531, %v532
        %v534 = vrot.slane %v533, 1
        %v535 = vadd.f32 %v533, %v534
        %v536 = vsel %vm374, %v329, 0.0
        %v537 = vrot.slane %v536, 4
        %v538 = vadd.f32 %v536, %v537
        %v539 = vrot.slane %v538, 2
        %v540 = vadd.f32 %v538, %v539
        %v541 = vrot.slane %v540, 1
        %v542 = vadd.f32 %v540, %v541
        %v543 = vsel %vm374, %v334, 0.0
        %v544 = vrot.slane %v543, 4
        %v545 = vadd.f32 %v543, %v544
        %v546 = vrot.slane %v545, 2
        %v547 = vadd.f32 %v545, %v546
        %v548 = vrot.slane %v547, 1
        %v549 = vadd.f32 %v547, %v548
        %v550 = vsel %vm374, %v335, 0.0
        %v551 = vrot.slane %v550, 4
        %v552 = vadd.f32 %v550, %v551
        %v553 = vrot.slane %v552, 2
        %v554 = vadd.f32 %v552, %v553
        %v555 = vrot.slane %v554, 1
        %v556 = vadd.f32 %v554, %v555
        %v557 = vsel %vm374, %v336, 0.0
        %v558 = vrot.slane %v557, 4
        %v559 = vadd.f32 %v557, %v558
        %v560 = vrot.slane %v559, 2
        %v561 = vadd.f32 %v559, %v560
        %v562 = vrot.slane %v561, 1
        %v563 = vadd.f32 %v561, %v562
        %v564 = vsel %vm374, %v337, 0.0
        %v565 = vrot.slane %v564, 4
        %v566 = vadd.f32 %v564, %v565
        %v567 = vrot.slane %v566, 2
        %v568 = vadd.f32 %v566, %v567
        %v569 = vrot.slane %v568, 1
        %v570 = vadd.f32 %v568, %v569
        %v571 = vsel %vm374, %v338, 0.0
        %v572 = vrot.slane %v571, 4
        %v573 = vadd.f32 %v571, %v572
        %v574 = vrot.slane %v573, 2
        %v575 = vadd.f32 %v573, %v574
        %v576 = vrot.slane %v575, 1
        %v577 = vadd.f32 %v575, %v576
        %v578 = vsel %vm374, %v339, 0.0
        %v579 = vrot.slane %v578, 4
        %v580 = vadd.f32 %v578, %v579
        %v581 = vrot.slane %v580, 2
        %v582 = vadd.f32 %v580, %v581
        %v583 = vrot.slane %v582, 1
        %v584 = vadd.f32 %v582, %v583
        %v585 = vsel %vm374, %v340, 0.0
        %v586 = vrot.slane %v585, 4
        %v587 = vadd.f32 %v585, %v586
        %v588 = vrot.slane %v587, 2
        %v589 = vadd.f32 %v587, %v588
        %v590 = vrot.slane %v589, 1
        %v591 = vadd.f32 %v589, %v590
        %v592 = vsel %vm374, %v341, 0.0
        %v593 = vrot.slane %v592, 4
        %v594 = vadd.f32 %v592, %v593
        %v595 = vrot.slane %v594, 2
        %v596 = vadd.f32 %v594, %v595
        %v597 = vrot.slane %v596, 1
        %v598 = vadd.f32 %v596, %v597
        %s599 = sld [smem:[#allocation5]]
        %v600 = vstv %s599
        %v601 = vadd.f32 %v381, %v600
        %v602 = vadd.f32 %v388, %v600
        %v603 = vadd.f32 %v395, %v600
        %v604 = vadd.f32 %v402, %v600
        %v605 = vadd.f32 %v409, %v600
        %v606 = vadd.f32 %v416, %v600
        %v607 = vadd.f32 %v423, %v600
        %v608 = vadd.f32 %v430, %v600
        %v609 = vadd.f32 %v437, %v600
        %v610 = vadd.f32 %v444, %v600
        %v611 = vadd.f32 %v451, %v600
        %v612 = vadd.f32 %v458, %v600
        %v613 = vadd.f32 %v465, %v600
        %v614 = vadd.f32 %v472, %v600
        %v615 = vadd.f32 %v479, %v600
        %v616 = vadd.f32 %v486, %v600
        %v617 = vadd.f32 %v493, %v600
        %v618 = vadd.f32 %v500, %v600
        %v619 = vadd.f32 %v507, %v600
        %v620 = vadd.f32 %v514, %v600
        %v621 = vadd.f32 %v521, %v600
        %v622 = vadd.f32 %v528, %v600
        %v623 = vadd.f32 %v535, %v600
        %v624 = vadd.f32 %v542, %v600
        %v625 = vadd.f32 %v549, %v600
        %v626 = vadd.f32 %v556, %v600
        %v627 = vadd.f32 %v563, %v600
        %v628 = vadd.f32 %v570, %v600
        %v629 = vadd.f32 %v577, %v600
        %v630 = vadd.f32 %v584, %v600
        %v631 = vadd.f32 %v591, %v600
        %v632 = vadd.f32 %v598, %v600
        %v665 = vrot.slane %v602, 7
        %v666 = vrot.slane %v603, 6
        %v667 = vrot.slane %v604, 5
        %v668 = vrot.slane %v605, 4
        %v669 = vrot.slane %v606, 3
        %v670 = vrot.slane %v607, 2
        %v671 = vrot.slane %v608, 1
        %v672 = vrot.slane %v610, 7
        %v673 = vrot.slane %v611, 6
        %v674 = vrot.slane %v612, 5
        %v675 = vrot.slane %v613, 4
        %v676 = vrot.slane %v614, 3
        %v677 = vrot.slane %v615, 2
        %v678 = vrot.slane %v616, 1
        %v679 = vrot.slane %v618, 7
        %v680 = vrot.slane %v619, 6
        %v681 = vrot.slane %v620, 5
        %v682 = vrot.slane %v621, 4
        %v683 = vrot.slane %v622, 3
        %v684 = vrot.slane %v623, 2
        %v685 = vrot.slane %v624, 1
        %v686 = vrot.slane %v626, 7
        %v687 = vrot.slane %v627, 6
        %v688 = vrot.slane %v628, 5
        %v689 = vrot.slane %v629, 4
        %v690 = vrot.slane %v630, 3
        %v691 = vrot.slane %v631, 2
        %v692 = vrot.slane %v632, 1
        %vm693 = vcmask 1040384
        %v694 = vsel %vm693, %v601, %v665
        %vm695 = vcmask 1042434
        %v696 = vsel %vm695, %v666, %v667
        %vm697 = vcmask 1041408
        %v698 = vsel %vm697, %v694, %v696
        %vm699 = vcmask 1044484
        %v700 = vsel %vm699, %v668, %v669
        %vm701 = vcmask 1046534
        %v702 = vsel %vm701, %v670, %v671
        %vm703 = vcmask 1045508
        %v704 = vsel %vm703, %v700, %v702
        %v705 = vsel %vm374, %v698, %v704
        %v706 = vsel %vm693, %v609, %v672
        %v707 = vsel %vm695, %v673, %v674
        %v708 = vsel %vm697, %v706, %v707
        %v709 = vsel %vm699, %v675, %v676
        %v710 = vsel %vm701, %v677, %v678
        %v711 = vsel %vm703, %v709, %v710
        %v712 = vsel %vm374, %v708, %v711
        %v713 = vsel %vm693, %v617, %v679
        %v714 = vsel %vm695, %v680, %v681
        %v715 = vsel %vm697, %v713, %v714
        %v716 = vsel %vm699, %v682, %v683
        %v717 = vsel %vm701, %v684, %v685
        %v718 = vsel %vm703, %v716, %v717
        %v719 = vsel %vm374, %v715, %v718
        %v720 = vsel %vm693, %v625, %v686
        %v721 = vsel %vm695, %v687, %v688
        %v722 = vsel %vm697, %v720, %v721
        %v723 = vsel %vm699, %v689, %v690
        %v724 = vsel %vm701, %v691, %v692
        %v725 = vsel %vm703, %v723, %v724
        %v726 = vsel %vm374, %v722, %v725
        %731 = vst [vmem:[%s231] ss:$4 sm:$0xff] %v705
        %s732 = scalar_lea.vmem %s231, 32
        %733 = vst [vmem:[%s732] ss:$4 sm:$0xff] %v712
        %s734 = scalar_lea.vmem %s231, 64
        %735 = vst [vmem:[%s734] ss:$4 sm:$0xff] %v719
        %s736 = scalar_lea.vmem %s231, 96
        %737 = vst [vmem:[%s736] ss:$4 sm:$0xff] %v726
        %s738 = scalar_lea.vmem %s1, 4
        %v739 = vld [vmem:[%s738] sm:$0xf]
        %741 = vset.pattern.permute.xlu0 0
        %742 = vperm.xlu0 %741, %v739
        %v743 = vpop.permute.xlu0 %742
        %v745 = vunpack.c.l.s4 839922192
        %v746 = vunpack.c.0.s8 %v745
        %v747 = vperm.slane %v743, %v746
        %v749 = vmul.f32 %v233, %v747
        %v750 = vmul.f32 %v234, %v747
        %v751 = vmul.f32 %v235, %v747
        %v752 = vmul.f32 %v236, %v747
        %v753 = vmul.f32 %v237, %v747
        %v754 = vmul.f32 %v238, %v747
        %v755 = vmul.f32 %v239, %v747
        %v756 = vmul.f32 %v240, %v747
        %v757 = vmul.f32 %v241, %v747
        %v758 = vmul.f32 %v242, %v747
        %v759 = vmul.f32 %v243, %v747
        %v760 = vmul.f32 %v244, %v747
        %v761 = vmul.f32 %v245, %v747
        %v762 = vmul.f32 %v246, %v747
        %v763 = vmul.f32 %v247, %v747
        %v764 = vmul.f32 %v248, %v747
        %781 = vst [vmem:[#allocation1] ss:$2 sm:$0xff] %v749
        %s782 = scalar_lea.vmem [#allocation1], 16
        %783 = vst [vmem:[%s782] ss:$2 sm:$0xff] %v750
        %s784 = scalar_lea.vmem [#allocation1], 32
        %785 = vst [vmem:[%s784] ss:$2 sm:$0xff] %v751
        %s786 = scalar_lea.vmem [#allocation1], 48
        %787 = vst [vmem:[%s786] ss:$2 sm:$0xff] %v752
        %v788 = vld.sshfl [vmem:[#allocation1] sm:$0xff pattern:$0x75316420]
        %v789 = vld.sshfl [vmem:[#allocation1 + $0x8] sm:$0xff pattern:$0x75316420]
        %v790 = vld.sshfl [vmem:[#allocation1 + $0x10] sm:$0xff pattern:$0x75316420]
        %v791 = vld.sshfl [vmem:[#allocation1 + $0x18] sm:$0xff pattern:$0x75316420]
        %v792 = vld.sshfl [vmem:[#allocation1 + $0x20] sm:$0xff pattern:$0x75316420]
        %v793 = vld.sshfl [vmem:[#allocation1 + $0x28] sm:$0xff pattern:$0x75316420]
        %v794 = vld.sshfl [vmem:[#allocation1 + $0x30] sm:$0xff pattern:$0x75316420]
        %v795 = vld.sshfl [vmem:[#allocation1 + $0x38] sm:$0xff pattern:$0x75316420]
        %796 = vst [vmem:[#allocation1] ss:$2 sm:$0xff] %v753
        %797 = vst [vmem:[%s782] ss:$2 sm:$0xff] %v754
        %798 = vst [vmem:[%s784] ss:$2 sm:$0xff] %v755
        %799 = vst [vmem:[%s786] ss:$2 sm:$0xff] %v756
        %v800 = vld.sshfl [vmem:[#allocation1] sm:$0xff pattern:$0x75316420]
        %v801 = vld.sshfl [vmem:[#allocation1 + $0x8] sm:$0xff pattern:$0x75316420]
        %v802 = vld.sshfl [vmem:[#allocation1 + $0x10] sm:$0xff pattern:$0x75316420]
        %v803 = vld.sshfl [vmem:[#allocation1 + $0x18] sm:$0xff pattern:$0x75316420]
        %v804 = vld.sshfl [vmem:[#allocation1 + $0x20] sm:$0xff pattern:$0x75316420]
        %v805 = vld.sshfl [vmem:[#allocation1 + $0x28] sm:$0xff pattern:$0x75316420]
        %v806 = vld.sshfl [vmem:[#allocation1 + $0x30] sm:$0xff pattern:$0x75316420]
        %v807 = vld.sshfl [vmem:[#allocation1 + $0x38] sm:$0xff pattern:$0x75316420]
        %808 = vst [vmem:[#allocation1] ss:$2 sm:$0xff] %v757
        %809 = vst [vmem:[%s782] ss:$2 sm:$0xff] %v758
        %810 = vst [vmem:[%s784] ss:$2 sm:$0xff] %v759
        %811 = vst [vmem:[%s786] ss:$2 sm:$0xff] %v760
        %v812 = vld.sshfl [vmem:[#allocation1] sm:$0xff pattern:$0x75316420]
        %v813 = vld.sshfl [vmem:[#allocation1 + $0x8] sm:$0xff pattern:$0x75316420]
        %v814 = vld.sshfl [vmem:[#allocation1 + $0x10] sm:$0xff pattern:$0x75316420]
        %v815 = vld.sshfl [vmem:[#allocation1 + $0x18] sm:$0xff pattern:$0x75316420]
        %v816 = vld.sshfl [vmem:[#allocation1 + $0x20] sm:$0xff pattern:$0x75316420]
        %v817 = vld.sshfl [vmem:[#allocation1 + $0x28] sm:$0xff pattern:$0x75316420]
        %v818 = vld.sshfl [vmem:[#allocation1 + $0x30] sm:$0xff pattern:$0x75316420]
        %v819 = vld.sshfl [vmem:[#allocation1 + $0x38] sm:$0xff pattern:$0x75316420]
        %820 = vst [vmem:[#allocation1] ss:$2 sm:$0xff] %v761
        %821 = vst [vmem:[%s782] ss:$2 sm:$0xff] %v762
        %822 = vst [vmem:[%s784] ss:$2 sm:$0xff] %v763
        %823 = vst [vmem:[%s786] ss:$2 sm:$0xff] %v764
        %v824 = vld.sshfl [vmem:[#allocation1] sm:$0xff pattern:$0x75316420]
        %v825 = vld.sshfl [vmem:[#allocation1 + $0x8] sm:$0xff pattern:$0x75316420]
        %v826 = vld.sshfl [vmem:[#allocation1 + $0x10] sm:$0xff pattern:$0x75316420]
        %v827 = vld.sshfl [vmem:[#allocation1 + $0x18] sm:$0xff pattern:$0x75316420]
        %v828 = vld.sshfl [vmem:[#allocation1 + $0x20] sm:$0xff pattern:$0x75316420]
        %v829 = vld.sshfl [vmem:[#allocation1 + $0x28] sm:$0xff pattern:$0x75316420]
        %v830 = vld.sshfl [vmem:[#allocation1 + $0x30] sm:$0xff pattern:$0x75316420]
        %v831 = vld.sshfl [vmem:[#allocation1 + $0x38] sm:$0xff pattern:$0x75316420]
        %v864 = vsel %vm374, %v788, 0.0
        %v865 = vrot.slane %v864, 4
        %v866 = vadd.f32 %v864, %v865
        %v867 = vrot.slane %v866, 2
        %v868 = vadd.f32 %v866, %v867
        %v869 = vrot.slane %v868, 1
        %v870 = vadd.f32 %v868, %v869
        %v871 = vsel %vm374, %v789, 0.0
        %v872 = vrot.slane %v871, 4
        %v873 = vadd.f32 %v871, %v872
        %v874 = vrot.slane %v873, 2
        %v875 = vadd.f32 %v873, %v874
        %v876 = vrot.slane %v875, 1
        %v877 = vadd.f32 %v875, %v876
        %v878 = vsel %vm374, %v790, 0.0
        %v879 = vrot.slane %v878, 4
        %v880 = vadd.f32 %v878, %v879
        %v881 = vrot.slane %v880, 2
        %v882 = vadd.f32 %v880, %v881
        %v883 = vrot.slane %v882, 1
        %v884 = vadd.f32 %v882, %v883
        %v885 = vsel %vm374, %v791, 0.0
        %v886 = vrot.slane %v885, 4
        %v887 = vadd.f32 %v885, %v886
        %v888 = vrot.slane %v887, 2
        %v889 = vadd.f32 %v887, %v888
        %v890 = vrot.slane %v889, 1
        %v891 = vadd.f32 %v889, %v890
        %v892 = vsel %vm374, %v792, 0.0
        %v893 = vrot.slane %v892, 4
        %v894 = vadd.f32 %v892, %v893
        %v895 = vrot.slane %v894, 2
        %v896 = vadd.f32 %v894, %v895
        %v897 = vrot.slane %v896, 1
        %v898 = vadd.f32 %v896, %v897
        %v899 = vsel %vm374, %v793, 0.0
        %v900 = vrot.slane %v899, 4
        %v901 = vadd.f32 %v899, %v900
        %v902 = vrot.slane %v901, 2
        %v903 = vadd.f32 %v901, %v902
        %v904 = vrot.slane %v903, 1
        %v905 = vadd.f32 %v903, %v904
        %v906 = vsel %vm374, %v794, 0.0
        %v907 = vrot.slane %v906, 4
        %v908 = vadd.f32 %v906, %v907
        %v909 = vrot.slane %v908, 2
        %v910 = vadd.f32 %v908, %v909
        %v911 = vrot.slane %v910, 1
        %v912 = vadd.f32 %v910, %v911
        %v913 = vsel %vm374, %v795, 0.0
        %v914 = vrot.slane %v913, 4
        %v915 = vadd.f32 %v913, %v914
        %v916 = vrot.slane %v915, 2
        %v917 = vadd.f32 %v915, %v916
        %v918 = vrot.slane %v917, 1
        %v919 = vadd.f32 %v917, %v918
        %v920 = vsel %vm374, %v800, 0.0
        %v921 = vrot.slane %v920, 4
        %v922 = vadd.f32 %v920, %v921
        %v923 = vrot.slane %v922, 2
        %v924 = vadd.f32 %v922, %v923
        %v925 = vrot.slane %v924, 1
        %v926 = vadd.f32 %v924, %v925
        %v927 = vsel %vm374, %v801, 0.0
        %v928 = vrot.slane %v927, 4
        %v929 = vadd.f32 %v927, %v928
        %v930 = vrot.slane %v929, 2
        %v931 = vadd.f32 %v929, %v930
        %v932 = vrot.slane %v931, 1
        %v933 = vadd.f32 %v931, %v932
        %v934 = vsel %vm374, %v802, 0.0
        %v935 = vrot.slane %v934, 4
        %v936 = vadd.f32 %v934, %v935
        %v937 = vrot.slane %v936, 2
        %v938 = vadd.f32 %v936, %v937
        %v939 = vrot.slane %v938, 1
        %v940 = vadd.f32 %v938, %v939
        %v941 = vsel %vm374, %v803, 0.0
        %v942 = vrot.slane %v941, 4
        %v943 = vadd.f32 %v941, %v942
        %v944 = vrot.slane %v943, 2
        %v945 = vadd.f32 %v943, %v944
        %v946 = vrot.slane %v945, 1
        %v947 = vadd.f32 %v945, %v946
        %v948 = vsel %vm374, %v804, 0.0
        %v949 = vrot.slane %v948, 4
        %v950 = vadd.f32 %v948, %v949
        %v951 = vrot.slane %v950, 2
        %v952 = vadd.f32 %v950, %v951
        %v953 = vrot.slane %v952, 1
        %v954 = vadd.f32 %v952, %v953
        %v955 = vsel %vm374, %v805, 0.0
        %v956 = vrot.slane %v955, 4
        %v957 = vadd.f32 %v955, %v956
        %v958 = vrot.slane %v957, 2
        %v959 = vadd.f32 %v957, %v958
        %v960 = vrot.slane %v959, 1
        %v961 = vadd.f32 %v959, %v960
        %v962 = vsel %vm374, %v806, 0.0
        %v963 = vrot.slane %v962, 4
        %v964 = vadd.f32 %v962, %v963
        %v965 = vrot.slane %v964, 2
        %v966 = vadd.f32 %v964, %v965
        %v967 = vrot.slane %v966, 1
        %v968 = vadd.f32 %v966, %v967
        %v969 = vsel %vm374, %v807, 0.0
        %v970 = vrot.slane %v969, 4
        %v971 = vadd.f32 %v969, %v970
        %v972 = vrot.slane %v971, 2
        %v973 = vadd.f32 %v971, %v972
        %v974 = vrot.slane %v973, 1
        %v975 = vadd.f32 %v973, %v974
        %v976 = vsel %vm374, %v812, 0.0
        %v977 = vrot.slane %v976, 4
        %v978 = vadd.f32 %v976, %v977
        %v979 = vrot.slane %v978, 2
        %v980 = vadd.f32 %v978, %v979
        %v981 = vrot.slane %v980, 1
        %v982 = vadd.f32 %v980, %v981
        %v983 = vsel %vm374, %v813, 0.0
        %v984 = vrot.slane %v983, 4
        %v985 = vadd.f32 %v983, %v984
        %v986 = vrot.slane %v985, 2
        %v987 = vadd.f32 %v985, %v986
        %v988 = vrot.slane %v987, 1
        %v989 = vadd.f32 %v987, %v988
        %v990 = vsel %vm374, %v814, 0.0
        %v991 = vrot.slane %v990, 4
        %v992 = vadd.f32 %v990, %v991
        %v993 = vrot.slane %v992, 2
        %v994 = vadd.f32 %v992, %v993
        %v995 = vrot.slane %v994, 1
        %v996 = vadd.f32 %v994, %v995
        %v997 = vsel %vm374, %v815, 0.0
        %v998 = vrot.slane %v997, 4
        %v999 = vadd.f32 %v997, %v998
        %v1000 = vrot.slane %v999, 2
        %v1001 = vadd.f32 %v999, %v1000
        %v1002 = vrot.slane %v1001, 1
        %v1003 = vadd.f32 %v1001, %v1002
        %v1004 = vsel %vm374, %v816, 0.0
        %v1005 = vrot.slane %v1004, 4
        %v1006 = vadd.f32 %v1004, %v1005
        %v1007 = vrot.slane %v1006, 2
        %v1008 = vadd.f32 %v1006, %v1007
        %v1009 = vrot.slane %v1008, 1
        %v1010 = vadd.f32 %v1008, %v1009
        %v1011 = vsel %vm374, %v817, 0.0
        %v1012 = vrot.slane %v1011, 4
        %v1013 = vadd.f32 %v1011, %v1012
        %v1014 = vrot.slane %v1013, 2
        %v1015 = vadd.f32 %v1013, %v1014
        %v1016 = vrot.slane %v1015, 1
        %v1017 = vadd.f32 %v1015, %v1016
        %v1018 = vsel %vm374, %v818, 0.0
        %v1019 = vrot.slane %v1018, 4
        %v1020 = vadd.f32 %v1018, %v1019
        %v1021 = vrot.slane %v1020, 2
        %v1022 = vadd.f32 %v1020, %v1021
        %v1023 = vrot.slane %v1022, 1
        %v1024 = vadd.f32 %v1022, %v1023
        %v1025 = vsel %vm374, %v819, 0.0
        %v1026 = vrot.slane %v1025, 4
        %v1027 = vadd.f32 %v1025, %v1026
        %v1028 = vrot.slane %v1027, 2
        %v1029 = vadd.f32 %v1027, %v1028
        %v1030 = vrot.slane %v1029, 1
        %v1031 = vadd.f32 %v1029, %v1030
        %v1032 = vsel %vm374, %v824, 0.0
        %v1033 = vrot.slane %v1032, 4
        %v1034 = vadd.f32 %v1032, %v1033
        %v1035 = vrot.slane %v1034, 2
        %v1036 = vadd.f32 %v1034, %v1035
        %v1037 = vrot.slane %v1036, 1
        %v1038 = vadd.f32 %v1036, %v1037
        %v1039 = vsel %vm374, %v825, 0.0
        %v1040 = vrot.slane %v1039, 4
        %v1041 = vadd.f32 %v1039, %v1040
        %v1042 = vrot.slane %v1041, 2
        %v1043 = vadd.f32 %v1041, %v1042
        %v1044 = vrot.slane %v1043, 1
        %v1045 = vadd.f32 %v1043, %v1044
        %v1046 = vsel %vm374, %v826, 0.0
        %v1047 = vrot.slane %v1046, 4
        %v1048 = vadd.f32 %v1046, %v1047
        %v1049 = vrot.slane %v1048, 2
        %v1050 = vadd.f32 %v1048, %v1049
        %v1051 = vrot.slane %v1050, 1
        %v1052 = vadd.f32 %v1050, %v1051
        %v1053 = vsel %vm374, %v827, 0.0
        %v1054 = vrot.slane %v1053, 4
        %v1055 = vadd.f32 %v1053, %v1054
        %v1056 = vrot.slane %v1055, 2
        %v1057 = vadd.f32 %v1055, %v1056
        %v1058 = vrot.slane %v1057, 1
        %v1059 = vadd.f32 %v1057, %v1058
        %v1060 = vsel %vm374, %v828, 0.0
        %v1061 = vrot.slane %v1060, 4
        %v1062 = vadd.f32 %v1060, %v1061
        %v1063 = vrot.slane %v1062, 2
        %v1064 = vadd.f32 %v1062, %v1063
        %v1065 = vrot.slane %v1064, 1
        %v1066 = vadd.f32 %v1064, %v1065
        %v1067 = vsel %vm374, %v829, 0.0
        %v1068 = vrot.slane %v1067, 4
        %v1069 = vadd.f32 %v1067, %v1068
        %v1070 = vrot.slane %v1069, 2
        %v1071 = vadd.f32 %v1069, %v1070
        %v1072 = vrot.slane %v1071, 1
        %v1073 = vadd.f32 %v1071, %v1072
        %v1074 = vsel %vm374, %v830, 0.0
        %v1075 = vrot.slane %v1074, 4
        %v1076 = vadd.f32 %v1074, %v1075
        %v1077 = vrot.slane %v1076, 2
        %v1078 = vadd.f32 %v1076, %v1077
        %v1079 = vrot.slane %v1078, 1
        %v1080 = vadd.f32 %v1078, %v1079
        %v1081 = vsel %vm374, %v831, 0.0
        %v1082 = vrot.slane %v1081, 4
        %v1083 = vadd.f32 %v1081, %v1082
        %v1084 = vrot.slane %v1083, 2
        %v1085 = vadd.f32 %v1083, %v1084
        %v1086 = vrot.slane %v1085, 1
        %v1087 = vadd.f32 %v1085, %v1086
        %s1088 = sld [smem:[#allocation5 + $0x1]]
        %v1089 = vstv %s1088
        %v1090 = vadd.f32 %v870, %v1089
        %v1091 = vadd.f32 %v877, %v1089
        %v1092 = vadd.f32 %v884, %v1089
        %v1093 = vadd.f32 %v891, %v1089
        %v1094 = vadd.f32 %v898, %v1089
        %v1095 = vadd.f32 %v905, %v1089
        %v1096 = vadd.f32 %v912, %v1089
        %v1097 = vadd.f32 %v919, %v1089
        %v1098 = vadd.f32 %v926, %v1089
        %v1099 = vadd.f32 %v933, %v1089
        %v1100 = vadd.f32 %v940, %v1089
        %v1101 = vadd.f32 %v947, %v1089
        %v1102 = vadd.f32 %v954, %v1089
        %v1103 = vadd.f32 %v961, %v1089
        %v1104 = vadd.f32 %v968, %v1089
        %v1105 = vadd.f32 %v975, %v1089
        %v1106 = vadd.f32 %v982, %v1089
        %v1107 = vadd.f32 %v989, %v1089
        %v1108 = vadd.f32 %v996, %v1089
        %v1109 = vadd.f32 %v1003, %v1089
        %v1110 = vadd.f32 %v1010, %v1089
        %v1111 = vadd.f32 %v1017, %v1089
        %v1112 = vadd.f32 %v1024, %v1089
        %v1113 = vadd.f32 %v1031, %v1089
        %v1114 = vadd.f32 %v1038, %v1089
        %v1115 = vadd.f32 %v1045, %v1089
        %v1116 = vadd.f32 %v1052, %v1089
        %v1117 = vadd.f32 %v1059, %v1089
        %v1118 = vadd.f32 %v1066, %v1089
        %v1119 = vadd.f32 %v1073, %v1089
        %v1120 = vadd.f32 %v1080, %v1089
        %v1121 = vadd.f32 %v1087, %v1089
        %v1154 = vrot.slane %v1091, 7
        %v1155 = vrot.slane %v1092, 6
        %v1156 = vrot.slane %v1093, 5
        %v1157 = vrot.slane %v1094, 4
        %v1158 = vrot.slane %v1095, 3
        %v1159 = vrot.slane %v1096, 2
        %v1160 = vrot.slane %v1097, 1
        %v1161 = vrot.slane %v1099, 7
        %v1162 = vrot.slane %v1100, 6
        %v1163 = vrot.slane %v1101, 5
        %v1164 = vrot.slane %v1102, 4
        %v1165 = vrot.slane %v1103, 3
        %v1166 = vrot.slane %v1104, 2
        %v1167 = vrot.slane %v1105, 1
        %v1168 = vrot.slane %v1107, 7
        %v1169 = vrot.slane %v1108, 6
        %v1170 = vrot.slane %v1109, 5
        %v1171 = vrot.slane %v1110, 4
        %v1172 = vrot.slane %v1111, 3
        %v1173 = vrot.slane %v1112, 2
        %v1174 = vrot.slane %v1113, 1
        %v1175 = vrot.slane %v1115, 7
        %v1176 = vrot.slane %v1116, 6
        %v1177 = vrot.slane %v1117, 5
        %v1178 = vrot.slane %v1118, 4
        %v1179 = vrot.slane %v1119, 3
        %v1180 = vrot.slane %v1120, 2
        %v1181 = vrot.slane %v1121, 1
        %v1182 = vsel %vm693, %v1090, %v1154
        %v1183 = vsel %vm695, %v1155, %v1156
        %v1184 = vsel %vm697, %v1182, %v1183
        %v1185 = vsel %vm699, %v1157, %v1158
        %v1186 = vsel %vm701, %v1159, %v1160
        %v1187 = vsel %vm703, %v1185, %v1186
        %v1188 = vsel %vm374, %v1184, %v1187
        %v1189 = vsel %vm693, %v1098, %v1161
        %v1190 = vsel %vm695, %v1162, %v1163
        %v1191 = vsel %vm697, %v1189, %v1190
        %v1192 = vsel %vm699, %v1164, %v1165
        %v1193 = vsel %vm701, %v1166, %v1167
        %v1194 = vsel %vm703, %v1192, %v1193
        %v1195 = vsel %vm374, %v1191, %v1194
        %v1196 = vsel %vm693, %v1106, %v1168
        %v1197 = vsel %vm695, %v1169, %v1170
        %v1198 = vsel %vm697, %v1196, %v1197
        %v1199 = vsel %vm699, %v1171, %v1172
        %v1200 = vsel %vm701, %v1173, %v1174
        %v1201 = vsel %vm703, %v1199, %v1200
        %v1202 = vsel %vm374, %v1198, %v1201
        %v1203 = vsel %vm693, %v1114, %v1175
        %v1204 = vsel %vm695, %v1176, %v1177
        %v1205 = vsel %vm697, %v1203, %v1204
        %v1206 = vsel %vm699, %v1178, %v1179
        %v1207 = vsel %vm701, %v1180, %v1181
        %v1208 = vsel %vm703, %v1206, %v1207
        %v1209 = vsel %vm374, %v1205, %v1208
        %s1214 = scalar_lea.vmem %s231, 1
        %1215 = vst [vmem:[%s1214] ss:$4 sm:$0xff] %v1188
        %s1216 = scalar_lea.vmem %s231, 33
        %1217 = vst [vmem:[%s1216] ss:$4 sm:$0xff] %v1195
        %s1218 = scalar_lea.vmem %s231, 65
        %1219 = vst [vmem:[%s1218] ss:$4 sm:$0xff] %v1202
        %s1220 = scalar_lea.vmem %s231, 97
        %1221 = vst [vmem:[%s1220] ss:$4 sm:$0xff] %v1209
        %s1222 = scalar_lea.vmem %s1, 8
        %v1223 = vld [vmem:[%s1222] sm:$0xf]
        %1225 = vset.pattern.permute.xlu0 0
        %1226 = vperm.xlu0 %1225, %v1223
        %v1227 = vpop.permute.xlu0 %1226
        %v1229 = vunpack.c.l.s4 839922192
        %v1230 = vunpack.c.0.s8 %v1229
        %v1231 = vperm.slane %v1227, %v1230
        %v1233 = vmul.f32 %v233, %v1231
        %v1234 = vmul.f32 %v234, %v1231
        %v1235 = vmul.f32 %v235, %v1231
        %v1236 = vmul.f32 %v236, %v1231
        %v1237 = vmul.f32 %v237, %v1231
        %v1238 = vmul.f32 %v238, %v1231
        %v1239 = vmul.f32 %v239, %v1231
        %v1240 = vmul.f32 %v240, %v1231
        %v1241 = vmul.f32 %v241, %v1231
        %v1242 = vmul.f32 %v242, %v1231
        %v1243 = vmul.f32 %v243, %v1231
        %v1244 = vmul.f32 %v244, %v1231
        %v1245 = vmul.f32 %v245, %v1231
        %v1246 = vmul.f32 %v246, %v1231
        %v1247 = vmul.f32 %v247, %v1231
        %v1248 = vmul.f32 %v248, %v1231
        %1265 = vst [vmem:[#allocation1] ss:$2 sm:$0xff] %v1233
        %s1266 = scalar_lea.vmem [#allocation1], 16
        %1267 = vst [vmem:[%s1266] ss:$2 sm:$0xff] %v1234
        %s1268 = scalar_lea.vmem [#allocation1], 32
        %1269 = vst [vmem:[%s1268] ss:$2 sm:$0xff] %v1235
        %s1270 = scalar_lea.vmem [#allocation1], 48
        %1271 = vst [vmem:[%s1270] ss:$2 sm:$0xff] %v1236
        %v1272 = vld.sshfl [vmem:[#allocation1] sm:$0xff pattern:$0x75316420]
        %v1273 = vld.sshfl [vmem:[#allocation1 + $0x8] sm:$0xff pattern:$0x75316420]
        %v1274 = vld.sshfl [vmem:[#allocation1 + $0x10] sm:$0xff pattern:$0x75316420]
        %v1275 = vld.sshfl [vmem:[#allocation1 + $0x18] sm:$0xff pattern:$0x75316420]
        %v1276 = vld.sshfl [vmem:[#allocation1 + $0x20] sm:$0xff pattern:$0x75316420]
        %v1277 = vld.sshfl [vmem:[#allocation1 + $0x28] sm:$0xff pattern:$0x75316420]
        %v1278 = vld.sshfl [vmem:[#allocation1 + $0x30] sm:$0xff pattern:$0x75316420]
        %v1279 = vld.sshfl [vmem:[#allocation1 + $0x38] sm:$0xff pattern:$0x75316420]
        %1280 = vst [vmem:[#allocation1] ss:$2 sm:$0xff] %v1237
        %1281 = vst [vmem:[%s1266] ss:$2 sm:$0xff] %v1238
        %1282 = vst [vmem:[%s1268] ss:$2 sm:$0xff] %v1239
        %1283 = vst [vmem:[%s1270] ss:$2 sm:$0xff] %v1240
        %v1284 = vld.sshfl [vmem:[#allocation1] sm:$0xff pattern:$0x75316420]
        %v1285 = vld.sshfl [vmem:[#allocation1 + $0x8] sm:$0xff pattern:$0x75316420]
        %v1286 = vld.sshfl [vmem:[#allocation1 + $0x10] sm:$0xff pattern:$0x75316420]
        %v1287 = vld.sshfl [vmem:[#allocation1 + $0x18] sm:$0xff pattern:$0x75316420]
        %v1288 = vld.sshfl [vmem:[#allocation1 + $0x20] sm:$0xff pattern:$0x75316420]
        %v1289 = vld.sshfl [vmem:[#allocation1 + $0x28] sm:$0xff pattern:$0x75316420]
        %v1290 = vld.sshfl [vmem:[#allocation1 + $0x30] sm:$0xff pattern:$0x75316420]
        %v1291 = vld.sshfl [vmem:[#allocation1 + $0x38] sm:$0xff pattern:$0x75316420]
        %1292 = vst [vmem:[#allocation1] ss:$2 sm:$0xff] %v1241
        %1293 = vst [vmem:[%s1266] ss:$2 sm:$0xff] %v1242
        %1294 = vst [vmem:[%s1268] ss:$2 sm:$0xff] %v1243
        %1295 = vst [vmem:[%s1270] ss:$2 sm:$0xff] %v1244
        %v1296 = vld.sshfl [vmem:[#allocation1] sm:$0xff pattern:$0x75316420]
        %v1297 = vld.sshfl [vmem:[#allocation1 + $0x8] sm:$0xff pattern:$0x75316420]
        %v1298 = vld.sshfl [vmem:[#allocation1 + $0x10] sm:$0xff pattern:$0x75316420]
        %v1299 = vld.sshfl [vmem:[#allocation1 + $0x18] sm:$0xff pattern:$0x75316420]
        %v1300 = vld.sshfl [vmem:[#allocation1 + $0x20] sm:$0xff pattern:$0x75316420]
        %v1301 = vld.sshfl [vmem:[#allocation1 + $0x28] sm:$0xff pattern:$0x75316420]
        %v1302 = vld.sshfl [vmem:[#allocation1 + $0x30] sm:$0xff pattern:$0x75316420]
        %v1303 = vld.sshfl [vmem:[#allocation1 + $0x38] sm:$0xff pattern:$0x75316420]
        %1304 = vst [vmem:[#allocation1] ss:$2 sm:$0xff] %v1245
        %1305 = vst [vmem:[%s1266] ss:$2 sm:$0xff] %v1246
        %1306 = vst [vmem:[%s1268] ss:$2 sm:$0xff] %v1247
        %1307 = vst [vmem:[%s1270] ss:$2 sm:$0xff] %v1248
        %v1308 = vld.sshfl [vmem:[#allocation1] sm:$0xff pattern:$0x75316420]
        %v1309 = vld.sshfl [vmem:[#allocation1 + $0x8] sm:$0xff pattern:$0x75316420]
        %v1310 = vld.sshfl [vmem:[#allocation1 + $0x10] sm:$0xff pattern:$0x75316420]
        %v1311 = vld.sshfl [vmem:[#allocation1 + $0x18] sm:$0xff pattern:$0x75316420]
        %v1312 = vld.sshfl [vmem:[#allocation1 + $0x20] sm:$0xff pattern:$0x75316420]
        %v1313 = vld.sshfl [vmem:[#allocation1 + $0x28] sm:$0xff pattern:$0x75316420]
        %v1314 = vld.sshfl [vmem:[#allocation1 + $0x30] sm:$0xff pattern:$0x75316420]
        %v1315 = vld.sshfl [vmem:[#allocation1 + $0x38] sm:$0xff pattern:$0x75316420]
        %v1348 = vsel %vm374, %v1272, 0.0
        %v1349 = vrot.slane %v1348, 4
        %v1350 = vadd.f32 %v1348, %v1349
        %v1351 = vrot.slane %v1350, 2
        %v1352 = vadd.f32 %v1350, %v1351
        %v1353 = vrot.slane %v1352, 1
        %v1354 = vadd.f32 %v1352, %v1353
        %v1355 = vsel %vm374, %v1273, 0.0
        %v1356 = vrot.slane %v1355, 4
        %v1357 = vadd.f32 %v1355, %v1356
        %v1358 = vrot.slane %v1357, 2
        %v1359 = vadd.f32 %v1357, %v1358
        %v1360 = vrot.slane %v1359, 1
        %v1361 = vadd.f32 %v1359, %v1360
        %v1362 = vsel %vm374, %v1274, 0.0
        %v1363 = vrot.slane %v1362, 4
        %v1364 = vadd.f32 %v1362, %v1363
        %v1365 = vrot.slane %v1364, 2
        %v1366 = vadd.f32 %v1364, %v1365
        %v1367 = vrot.slane %v1366, 1
        %v1368 = vadd.f32 %v1366, %v1367
        %v1369 = vsel %vm374, %v1275, 0.0
        %v1370 = vrot.slane %v1369, 4
        %v1371 = vadd.f32 %v1369, %v1370
        %v1372 = vrot.slane %v1371, 2
        %v1373 = vadd.f32 %v1371, %v1372
        %v1374 = vrot.slane %v1373, 1
        %v1375 = vadd.f32 %v1373, %v1374
        %v1376 = vsel %vm374, %v1276, 0.0
        %v1377 = vrot.slane %v1376, 4
        %v1378 = vadd.f32 %v1376, %v1377
        %v1379 = vrot.slane %v1378, 2
        %v1380 = vadd.f32 %v1378, %v1379
        %v1381 = vrot.slane %v1380, 1
        %v1382 = vadd.f32 %v1380, %v1381
        %v1383 = vsel %vm374, %v1277, 0.0
        %v1384 = vrot.slane %v1383, 4
        %v1385 = vadd.f32 %v1383, %v1384
        %v1386 = vrot.slane %v1385, 2
        %v1387 = vadd.f32 %v1385, %v1386
        %v1388 = vrot.slane %v1387, 1
        %v1389 = vadd.f32 %v1387, %v1388
        %v1390 = vsel %vm374, %v1278, 0.0
        %v1391 = vrot.slane %v1390, 4
        %v1392 = vadd.f32 %v1390, %v1391
        %v1393 = vrot.slane %v1392, 2
        %v1394 = vadd.f32 %v1392, %v1393
        %v1395 = vrot.slane %v1394, 1
        %v1396 = vadd.f32 %v1394, %v1395
        %v1397 = vsel %vm374, %v1279, 0.0
        %v1398 = vrot.slane %v1397, 4
        %v1399 = vadd.f32 %v1397, %v1398
        %v1400 = vrot.slane %v1399, 2
        %v1401 = vadd.f32 %v1399, %v1400
        %v1402 = vrot.slane %v1401, 1
        %v1403 = vadd.f32 %v1401, %v1402
        %v1404 = vsel %vm374, %v1284, 0.0
        %v1405 = vrot.slane %v1404, 4
        %v1406 = vadd.f32 %v1404, %v1405
        %v1407 = vrot.slane %v1406, 2
        %v1408 = vadd.f32 %v1406, %v1407
        %v1409 = vrot.slane %v1408, 1
        %v1410 = vadd.f32 %v1408, %v1409
        %v1411 = vsel %vm374, %v1285, 0.0
        %v1412 = vrot.slane %v1411, 4
        %v1413 = vadd.f32 %v1411, %v1412
        %v1414 = vrot.slane %v1413, 2
        %v1415 = vadd.f32 %v1413, %v1414
        %v1416 = vrot.slane %v1415, 1
        %v1417 = vadd.f32 %v1415, %v1416
        %v1418 = vsel %vm374, %v1286, 0.0
        %v1419 = vrot.slane %v1418, 4
        %v1420 = vadd.f32 %v1418, %v1419
        %v1421 = vrot.slane %v1420, 2
        %v1422 = vadd.f32 %v1420, %v1421
        %v1423 = vrot.slane %v1422, 1
        %v1424 = vadd.f32 %v1422, %v1423
        %v1425 = vsel %vm374, %v1287, 0.0
        %v1426 = vrot.slane %v1425, 4
        %v1427 = vadd.f32 %v1425, %v1426
        %v1428 = vrot.slane %v1427, 2
        %v1429 = vadd.f32 %v1427, %v1428
        %v1430 = vrot.slane %v1429, 1
        %v1431 = vadd.f32 %v1429, %v1430
        %v1432 = vsel %vm374, %v1288, 0.0
        %v1433 = vrot.slane %v1432, 4
        %v1434 = vadd.f32 %v1432, %v1433
        %v1435 = vrot.slane %v1434, 2
        %v1436 = vadd.f32 %v1434, %v1435
        %v1437 = vrot.slane %v1436, 1
        %v1438 = vadd.f32 %v1436, %v1437
        %v1439 = vsel %vm374, %v1289, 0.0
        %v1440 = vrot.slane %v1439, 4
        %v1441 = vadd.f32 %v1439, %v1440
        %v1442 = vrot.slane %v1441, 2
        %v1443 = vadd.f32 %v1441, %v1442
        %v1444 = vrot.slane %v1443, 1
        %v1445 = vadd.f32 %v1443, %v1444
        %v1446 = vsel %vm374, %v1290, 0.0
        %v1447 = vrot.slane %v1446, 4
        %v1448 = vadd.f32 %v1446, %v1447
        %v1449 = vrot.slane %v1448, 2
        %v1450 = vadd.f32 %v1448, %v1449
        %v1451 = vrot.slane %v1450, 1
        %v1452 = vadd.f32 %v1450, %v1451
        %v1453 = vsel %vm374, %v1291, 0.0
        %v1454 = vrot.slane %v1453, 4
        %v1455 = vadd.f32 %v1453, %v1454
        %v1456 = vrot.slane %v1455, 2
        %v1457 = vadd.f32 %v1455, %v1456
        %v1458 = vrot.slane %v1457, 1
        %v1459 = vadd.f32 %v1457, %v1458
        %v1460 = vsel %vm374, %v1296, 0.0
        %v1461 = vrot.slane %v1460, 4
        %v1462 = vadd.f32 %v1460, %v1461
        %v1463 = vrot.slane %v1462, 2
        %v1464 = vadd.f32 %v1462, %v1463
        %v1465 = vrot.slane %v1464, 1
        %v1466 = vadd.f32 %v1464, %v1465
        %v1467 = vsel %vm374, %v1297, 0.0
        %v1468 = vrot.slane %v1467, 4
        %v1469 = vadd.f32 %v1467, %v1468
        %v1470 = vrot.slane %v1469, 2
        %v1471 = vadd.f32 %v1469, %v1470
        %v1472 = vrot.slane %v1471, 1
        %v1473 = vadd.f32 %v1471, %v1472
        %v1474 = vsel %vm374, %v1298, 0.0
        %v1475 = vrot.slane %v1474, 4
        %v1476 = vadd.f32 %v1474, %v1475
        %v1477 = vrot.slane %v1476, 2
        %v1478 = vadd.f32 %v1476, %v1477
        %v1479 = vrot.slane %v1478, 1
        %v1480 = vadd.f32 %v1478, %v1479
        %v1481 = vsel %vm374, %v1299, 0.0
        %v1482 = vrot.slane %v1481, 4
        %v1483 = vadd.f32 %v1481, %v1482
        %v1484 = vrot.slane %v1483, 2
        %v1485 = vadd.f32 %v1483, %v1484
        %v1486 = vrot.slane %v1485, 1
        %v1487 = vadd.f32 %v1485, %v1486
        %v1488 = vsel %vm374, %v1300, 0.0
        %v1489 = vrot.slane %v1488, 4
        %v1490 = vadd.f32 %v1488, %v1489
        %v1491 = vrot.slane %v1490, 2
        %v1492 = vadd.f32 %v1490, %v1491
        %v1493 = vrot.slane %v1492, 1
        %v1494 = vadd.f32 %v1492, %v1493
        %v1495 = vsel %vm374, %v1301, 0.0
        %v1496 = vrot.slane %v1495, 4
        %v1497 = vadd.f32 %v1495, %v1496
        %v1498 = vrot.slane %v1497, 2
        %v1499 = vadd.f32 %v1497, %v1498
        %v1500 = vrot.slane %v1499, 1
        %v1501 = vadd.f32 %v1499, %v1500
        %v1502 = vsel %vm374, %v1302, 0.0
        %v1503 = vrot.slane %v1502, 4
        %v1504 = vadd.f32 %v1502, %v1503
        %v1505 = vrot.slane %v1504, 2
        %v1506 = vadd.f32 %v1504, %v1505
        %v1507 = vrot.slane %v1506, 1
        %v1508 = vadd.f32 %v1506, %v1507
        %v1509 = vsel %vm374, %v1303, 0.0
        %v1510 = vrot.slane %v1509, 4
        %v1511 = vadd.f32 %v1509, %v1510
        %v1512 = vrot.slane %v1511, 2
        %v1513 = vadd.f32 %v1511, %v1512
        %v1514 = vrot.slane %v1513, 1
        %v1515 = vadd.f32 %v1513, %v1514
        %v1516 = vsel %vm374, %v1308, 0.0
        %v1517 = vrot.slane %v1516, 4
        %v1518 = vadd.f32 %v1516, %v1517
        %v1519 = vrot.slane %v1518, 2
        %v1520 = vadd.f32 %v1518, %v1519
        %v1521 = vrot.slane %v1520, 1
        %v1522 = vadd.f32 %v1520, %v1521
        %v1523 = vsel %vm374, %v1309, 0.0
        %v1524 = vrot.slane %v1523, 4
        %v1525 = vadd.f32 %v1523, %v1524
        %v1526 = vrot.slane %v1525, 2
        %v1527 = vadd.f32 %v1525, %v1526
        %v1528 = vrot.slane %v1527, 1
        %v1529 = vadd.f32 %v1527, %v1528
        %v1530 = vsel %vm374, %v1310, 0.0
        %v1531 = vrot.slane %v1530, 4
        %v1532 = vadd.f32 %v1530, %v1531
        %v1533 = vrot.slane %v1532, 2
        %v1534 = vadd.f32 %v1532, %v1533
        %v1535 = vrot.slane %v1534, 1
        %v1536 = vadd.f32 %v1534, %v1535
        %v1537 = vsel %vm374, %v1311, 0.0
        %v1538 = vrot.slane %v1537, 4
        %v1539 = vadd.f32 %v1537, %v1538
        %v1540 = vrot.slane %v1539, 2
        %v1541 = vadd.f32 %v1539, %v1540
        %v1542 = vrot.slane %v1541, 1
        %v1543 = vadd.f32 %v1541, %v1542
        %v1544 = vsel %vm374, %v1312, 0.0
        %v1545 = vrot.slane %v1544, 4
        %v1546 = vadd.f32 %v1544, %v1545
        %v1547 = vrot.slane %v1546, 2
        %v1548 = vadd.f32 %v1546, %v1547
        %v1549 = vrot.slane %v1548, 1
        %v1550 = vadd.f32 %v1548, %v1549
        %v1551 = vsel %vm374, %v1313, 0.0
        %v1552 = vrot.slane %v1551, 4
        %v1553 = vadd.f32 %v1551, %v1552
        %v1554 = vrot.slane %v1553, 2
        %v1555 = vadd.f32 %v1553, %v1554
        %v1556 = vrot.slane %v1555, 1
        %v1557 = vadd.f32 %v1555, %v1556
        %v1558 = vsel %vm374, %v1314, 0.0
        %v1559 = vrot.slane %v1558, 4
        %v1560 = vadd.f32 %v1558, %v1559
        %v1561 = vrot.slane %v1560, 2
        %v1562 = vadd.f32 %v1560, %v1561
        %v1563 = vrot.slane %v1562, 1
        %v1564 = vadd.f32 %v1562, %v1563
        %v1565 = vsel %vm374, %v1315, 0.0
        %v1566 = vrot.slane %v1565, 4
        %v1567 = vadd.f32 %v1565, %v1566
        %v1568 = vrot.slane %v1567, 2
        %v1569 = vadd.f32 %v1567, %v1568
        %v1570 = vrot.slane %v1569, 1
        %v1571 = vadd.f32 %v1569, %v1570
        %s1572 = sld [smem:[#allocation5 + $0x2]]
        %v1573 = vstv %s1572
        %v1574 = vadd.f32 %v1354, %v1573
        %v1575 = vadd.f32 %v1361, %v1573
        %v1576 = vadd.f32 %v1368, %v1573
        %v1577 = vadd.f32 %v1375, %v1573
        %v1578 = vadd.f32 %v1382, %v1573
        %v1579 = vadd.f32 %v1389, %v1573
        %v1580 = vadd.f32 %v1396, %v1573
        %v1581 = vadd.f32 %v1403, %v1573
        %v1582 = vadd.f32 %v1410, %v1573
        %v1583 = vadd.f32 %v1417, %v1573
        %v1584 = vadd.f32 %v1424, %v1573
        %v1585 = vadd.f32 %v1431, %v1573
        %v1586 = vadd.f32 %v1438, %v1573
        %v1587 = vadd.f32 %v1445, %v1573
        %v1588 = vadd.f32 %v1452, %v1573
        %v1589 = vadd.f32 %v1459, %v1573
        %v1590 = vadd.f32 %v1466, %v1573
        %v1591 = vadd.f32 %v1473, %v1573
        %v1592 = vadd.f32 %v1480, %v1573
        %v1593 = vadd.f32 %v1487, %v1573
        %v1594 = vadd.f32 %v1494, %v1573
        %v1595 = vadd.f32 %v1501, %v1573
        %v1596 = vadd.f32 %v1508, %v1573
        %v1597 = vadd.f32 %v1515, %v1573
        %v1598 = vadd.f32 %v1522, %v1573
        %v1599 = vadd.f32 %v1529, %v1573
        %v1600 = vadd.f32 %v1536, %v1573
        %v1601 = vadd.f32 %v1543, %v1573
        %v1602 = vadd.f32 %v1550, %v1573
        %v1603 = vadd.f32 %v1557, %v1573
        %v1604 = vadd.f32 %v1564, %v1573
        %v1605 = vadd.f32 %v1571, %v1573
        %v1638 = vrot.slane %v1575, 7
        %v1639 = vrot.slane %v1576, 6
        %v1640 = vrot.slane %v1577, 5
        %v1641 = vrot.slane %v1578, 4
        %v1642 = vrot.slane %v1579, 3
        %v1643 = vrot.slane %v1580, 2
        %v1644 = vrot.slane %v1581, 1
        %v1645 = vrot.slane %v1583, 7
        %v1646 = vrot.slane %v1584, 6
        %v1647 = vrot.slane %v1585, 5
        %v1648 = vrot.slane %v1586, 4
        %v1649 = vrot.slane %v1587, 3
        %v1650 = vrot.slane %v1588, 2
        %v1651 = vrot.slane %v1589, 1
        %v1652 = vrot.slane %v1591, 7
        %v1653 = vrot.slane %v1592, 6
        %v1654 = vrot.slane %v1593, 5
        %v1655 = vrot.slane %v1594, 4
        %v1656 = vrot.slane %v1595, 3
        %v1657 = vrot.slane %v1596, 2
        %v1658 = vrot.slane %v1597, 1
        %v1659 = vrot.slane %v1599, 7
        %v1660 = vrot.slane %v1600, 6
        %v1661 = vrot.slane %v1601, 5
        %v1662 = vrot.slane %v1602, 4
        %v1663 = vrot.slane %v1603, 3
        %v1664 = vrot.slane %v1604, 2
        %v1665 = vrot.slane %v1605, 1
        %v1666 = vsel %vm693, %v1574, %v1638
        %v1667 = vsel %vm695, %v1639, %v1640
        %v1668 = vsel %vm697, %v1666, %v1667
        %v1669 = vsel %vm699, %v1641, %v1642
        %v1670 = vsel %vm701, %v1643, %v1644
        %v1671 = vsel %vm703, %v1669, %v1670
        %v1672 = vsel %vm374, %v1668, %v1671
        %v1673 = vsel %vm693, %v1582, %v1645
        %v1674 = vsel %vm695, %v1646, %v1647
        %v1675 = vsel %vm697, %v1673, %v1674
        %v1676 = vsel %vm699, %v1648, %v1649
        %v1677 = vsel %vm701, %v1650, %v1651
        %v1678 = vsel %vm703, %v1676, %v1677
        %v1679 = vsel %vm374, %v1675, %v1678
        %v1680 = vsel %vm693, %v1590, %v1652
        %v1681 = vsel %vm695, %v1653, %v1654
        %v1682 = vsel %vm697, %v1680, %v1681
        %v1683 = vsel %vm699, %v1655, %v1656
        %v1684 = vsel %vm701, %v1657, %v1658
        %v1685 = vsel %vm703, %v1683, %v1684
        %v1686 = vsel %vm374, %v1682, %v1685
        %v1687 = vsel %vm693, %v1598, %v1659
        %v1688 = vsel %vm695, %v1660, %v1661
        %v1689 = vsel %vm697, %v1687, %v1688
        %v1690 = vsel %vm699, %v1662, %v1663
        %v1691 = vsel %vm701, %v1664, %v1665
        %v1692 = vsel %vm703, %v1690, %v1691
        %v1693 = vsel %vm374, %v1689, %v1692
        %s1698 = scalar_lea.vmem %s231, 2
        %1699 = vst [vmem:[%s1698] ss:$4 sm:$0xff] %v1672
        %s1700 = scalar_lea.vmem %s231, 34
        %1701 = vst [vmem:[%s1700] ss:$4 sm:$0xff] %v1679
        %s1702 = scalar_lea.vmem %s231, 66
        %1703 = vst [vmem:[%s1702] ss:$4 sm:$0xff] %v1686
        %s1704 = scalar_lea.vmem %s231, 98
        %1705 = vst [vmem:[%s1704] ss:$4 sm:$0xff] %v1693
        %s1706 = smul.u32 32, %s23
        %p1707 = scmp.lt.s32.totalorder %s22, 1
        %s1708 = scalar_select %p1707, %s22, 1
        %p1709 = scmp.lt.s32.totalorder %s1706, 31
        %s1710 = scalar_select %p1709, %s1706, 31
        %s1711 = smul.addr %s1708, 32
        %s1712 = sadd.s32 %s1710, %s1711
        %s1713 = smul.addr %s1712, 4
        %s1714 = scalar_lea.vmem %s3, %s1713
        // Predicated region
        $region41: #{tpu_custom_call.1} parent=31 // pred_check
          %p1715 = pneg %p120
        $region42: #{tpu_custom_call.1} parent=31 // pred_check_branch
          %1717 = sbr.rel (%p1715) target = $region44
        $region43: #{tpu_custom_call.1} parent=31 // pred_region
          %s1718 = smul.u32 32, %s23
        $region44: #{tpu_custom_call.1} parent=31 // pred_fallthru
          _
      $region32: #{tpu_custom_call.1} parent=5 // pred_fallthru
        _
      %p1719 = scmp.le.s32.totalorder 2, %s13
      // Predicated region
      $region45: #{tpu_custom_call.1} parent=5 // pred_check
        %p1720 = pneg %p1719
      $region46: #{tpu_custom_call.1} parent=5 // pred_check_branch
        %1722 = sbr.rel (%p1720) target = $region48
      $region47: #{tpu_custom_call.1} parent=5 // pred_region
        %s1723 = ssub.s32 %s13, 2
        // Predicated region
        $region49: #{tpu_custom_call.1} parent=47 // pred_check
          %p1724 = pneg %p126
        $region50: #{tpu_custom_call.1} parent=47 // pred_check_branch
          %1726 = sbr.rel (%p1724) target = $region52
        $region51: #{tpu_custom_call.1} parent=47 // pred_region
          %s1727 = smul.u32 32, %s25
          %p1728 = scmp.lt.s32.totalorder %s24, 1
          %s1729 = scalar_select %p1728, %s24, 1
          %p1730 = scmp.lt.s32.totalorder %s1727, 31
          %s1731 = scalar_select %p1730, %s1727, 31
          %s1732 = smul.addr %s1729, 32
          %s1733 = sadd.s32 %s1731, %s1732
          %s1734 = smul.addr %s1733, 4
          %s1735 = scalar_lea.vmem %s3, %s1734
        $region52: #{tpu_custom_call.1} parent=47 // pred_fallthru
          _
      $region48: #{tpu_custom_call.1} parent=5 // pred_fallthru
        _
    $region6: #{tpu_custom_call.1} parent=1 // loop_footer
      %s17 = sadd.s32 1, %s13
    $region7: #{tpu_custom_call.1} parent=1 // loop_footer_branch
      %12 = sbr.rel target = $region3
    $region8: #{tpu_custom_call.1} parent=1 // loop_exit
      _
    %1736 = vsyncpa [#allocation3], 1
    %s1737 = scalar_lea.sflag [#allocation3], 1
    %1738 = vsyncpa %s1737, 1
    %1739 = vsyncpa [#allocation4], 1
    %s1740 = scalar_lea.sflag [#allocation4], 1
    %1741 = vsyncpa %s1740, 1

</llo_original>
